<compile_context>
chip_gen: v7x
topology: tpu7x:2x2x1
jax: 0.10.0
libtpu: 0.0.40
codegen_flags: <defaults>
</compile_context>

<pallas_src>
import functools

import jax
import jax.numpy as jnp
import numpy as np
from jax import lax
from jax.experimental import pallas as pl
from jax.experimental.pallas import tpu as pltpu

_HEADROOM = 8 * 2 ** 20          # Mosaic internal scratch / semaphores


def _vmem_capacity_bytes() -> int:
    try:
        return int(pltpu.get_tpu_info().vmem_capacity_bytes)
    except Exception:
        return 64 * 2 ** 20      # conservative (v7x per-core VMEM)


def _vmem_limit(cap: int, footprint: int) -> int:
    return int(min(int(0.85 * cap), max(32 * 2 ** 20, footprint + _HEADROOM)))


def _pick_gram_panel(hidden_dim: int, target: int = 512) -> int:
    """Gram-panel width: full D if small, else largest 128-multiple divisor <= target."""
    if hidden_dim <= target:
        return hidden_dim
    for c in range(target, 127, -128):
        if hidden_dim % c == 0:
            return c
    # TODO(synk): hidden_dim with no 128-multiple divisor falls back to one full panel
    # (VMEM-heavy); realistic transformer widths are multiples of 128.
    return hidden_dim


def _pick_seq_tile(seq_len: int, max_rows: int, cap: int = 1024):
    """(tile, padded_T): tile is a multiple of 8, divides padded_T and fits max_rows."""
    t8 = ((seq_len + 7) // 8) * 8
    limit = max(8, (min(int(max_rows), cap, t8) // 8) * 8)
    if t8 <= limit:
        return t8, t8
    for c in range(limit, 7, -8):             # prefer an exact divisor (no padding)
        if t8 % c == 0:
            if 2 * c >= limit:
                return c, t8
            break
    ntiles = -(-t8 // limit)                   # else pad T up to a multiple of the tile
    tile = ((-(-t8 // ntiles) + 7) // 8) * 8
    return tile, ntiles * tile


def _chunk_average_matrix(hidden_dim: int, dtype) -> jnp.ndarray:
    """M (D, C) with h @ M == h.view(T, num_chunks, C).mean(-2) (D divisible by C assumed,
    as in the PyTorch reference)."""
    chunk = max(1, hidden_dim // 16)
    num_chunks = hidden_dim // chunk
    m = np.zeros((hidden_dim, chunk), dtype=np.float32)
    for n in range(num_chunks):
        m[n * chunk:(n + 1) * chunk, :] = np.eye(chunk, dtype=np.float32) / num_chunks
    return jnp.asarray(m, dtype=dtype)


def _stream_kernel(t_ref, s_ref, m_ref, ratio_ref,
                   sums_ref, gsum_ref, invt_ref, invs_ref,
                   prev_t_ref, prev_s_ref, *, true_t: int):
    """Token-local terms, one (sample, seq-tile) grid step.

    t_ref/s_ref : (1, TQ, D) teacher / student tiles (native dtype)
    m_ref       : (D, C) chunk-averaging matrix
    ratio_ref   : (1, 1, 1) per-sample teacher/student abs-mean ratio
    sums_ref    : (1, 1, 8) running [content, cosine, local_sq, t_num, t_tt, t_ss, 0, 0]
    gsum_ref    : (1, 1, D) running sum over T of (t - s)
    invt/invs   : (1, TQ, 1) per-row inverse norms (consumed by the Gram kernel)
    prev_*      : (1, D) carried last rows for the cross-tile temporal difference
    """
    k = pl.program_id(1)
    tile = t_ref.shape[1]

    @pl.when(k == 0)
    def _init():
        sums_ref[...] = jnp.zeros_like(sums_ref)
        gsum_ref[...] = jnp.zeros_like(gsum_ref)
        prev_t_ref[...] = jnp.zeros_like(prev_t_ref)
        prev_s_ref[...] = jnp.zeros_like(prev_s_ref)

    t_in = t_ref[0]
    s_in = s_ref[0]
    tf = t_in.astype(jnp.float32)
    sf = s_in.astype(jnp.float32)

    a = jnp.sum(tf * tf, axis=-1, keepdims=True)        # ||t||^2 per row
    b = jnp.sum(tf * sf, axis=-1, keepdims=True)        # <t, s>
    c = jnp.sum(sf * sf, axis=-1, keepdims=True)        # ||s||^2

    # Inverse row norms for the Gram kernel (F.normalize eps = 1e-12).
    invt_ref[0] = 1.0 / jnp.maximum(jnp.sqrt(a), 1e-12)
    invs_ref[0] = 1.0 / jnp.maximum(jnp.sqrt(c), 1e-12)

    sub = lax.broadcasted_iota(jnp.int32, (tile, 1), 0)
    row = k * tile + sub
    valid = (row < true_t).astype(jnp.float32)           # masks padded tail rows

    # Cosine (torch.cosine_similarity clamps the product of norms at eps^2).
    cos = b * lax.rsqrt(jnp.maximum(a * c, 1e-16))
    cos_sum = jnp.sum(valid * (1.0 - cos))

    # Content: ||t - ratio * s||_2 per row, computed directly (no cancellation).
    ratio = ratio_ref[0]                                  # (1, 1) -> broadcasts
    e = tf - ratio * sf
    content_sum = jnp.sum(jnp.sqrt(jnp.sum(e * e, axis=-1, keepdims=True)))

    # Local + global share ds = t - s (linearity: local_t - local_s == ds @ M).
    dsf = tf - sf
    gsum_ref[0] += jnp.sum(dsf, axis=0, keepdims=True)
    lds = jnp.dot(dsf.astype(t_in.dtype), m_ref[...], preferred_element_type=jnp.float32)
    local_sq = jnp.sum(lds * lds)

    # Temporal first differences: XLU roll (row i <- row i+1), one (tile, 1) keep-mask
    # covering both the wrap row and the padded tail; cross-tile boundary difference uses
    # the carried last rows of the previous tile.
    keep = jnp.logical_and(sub < tile - 1, row + 1 < true_t).astype(jnp.float32)
    dt = keep * (pltpu.roll(tf, shift=tile - 1, axis=0) - tf)
    du = keep * (pltpu.roll(sf, shift=tile - 1, axis=0) - sf)
    t_num = jnp.sum(dt * du)
    t_tt = jnp.sum(dt * dt)
    t_ss = jnp.sum(du * du)

    bt = tf[0:1, :] - prev_t_ref[...]
    bs = sf[0:1, :] - prev_s_ref[...]
    on = (k > 0).astype(jnp.float32)
    t_num = t_num + on * jnp.sum(bt * bs)
    t_tt = t_tt + on * jnp.sum(bt * bt)
    t_ss = t_ss + on * jnp.sum(bs * bs)

    prev_t_ref[...] = tf[tile - 1:tile, :]
    prev_s_ref[...] = sf[tile - 1:tile, :]

    lane = lax.broadcasted_iota(jnp.int32, (1, 8), 1)

    def put(slot, val):
        return jnp.where(lane == slot, val, 0.0)

    sums_ref[0] += (put(0, content_sum) + put(1, cos_sum) + put(2, local_sq)
                    + put(3, t_num) + put(4, t_tt) + put(5, t_ss))


def _gram_kernel(t_i_ref, s_i_ref, t_j_ref, s_j_ref, invt_ref, invs_ref, out_ref,
                 guu_ref, gdd_ref, gdu_ref, gud_ref, dcov_ref):
    """Context + spectral terms for one (PB, PB) panel of the D x D Gram matrices.

    With normalized rows tn, sn, u = tn + sn, d = tn - sn:
        ||tn tn^T - sn sn^T||_F^2 = 0.5 * (<u^T u, d^T d> + <u^T d, d^T u>)
    and with raw rows, ur = t + s, dr = t - s:
        t^T t - s^T s = 0.5 * (ur^T dr + dr^T ur)
    Accumulated per (panel_i, panel_j) block over sequence tiles -> 5*PB^2 f32 in VMEM.
    """
    k = pl.program_id(3)
    kt = pl.num_programs(3)

    @pl.when(k == 0)
    def _init():
        guu_ref[...] = jnp.zeros_like(guu_ref)
        gdd_ref[...] = jnp.zeros_like(gdd_ref)
        gdu_ref[...] = jnp.zeros_like(gdu_ref)
        gud_ref[...] = jnp.zeros_like(gud_ref)
        dcov_ref[...] = jnp.zeros_like(dcov_ref)

    mm_dtype = t_i_ref.dtype
    it = invt_ref[0]                       # (TQ, 1) f32
    isv = invs_ref[0]

    def panel(t_ref, s_ref):
        t = t_ref[0].astype(jnp.float32)
        s = s_ref[0].astype(jnp.float32)
        tn = t * it
        sn = s * isv
        u = (tn + sn).astype(mm_dtype)
        d = (tn - sn).astype(mm_dtype)
        ur = (t + s).astype(mm_dtype)
        dr = (t - s).astype(mm_dtype)
        return u, d, ur, dr

    u_i, d_i, ur_i, dr_i = panel(t_i_ref, s_i_ref)
    u_j, d_j, ur_j, dr_j = panel(t_j_ref, s_j_ref)

    dims = (((0,), (0,)), ((), ()))        # contract the sequence axis (no transpose)

    def gram(x, y):
        return lax.dot_general(x, y, dimension_numbers=dims,
                               preferred_element_type=jnp.float32)

    guu_ref[...] += gram(u_i, u_j)
    gdd_ref[...] += gram(d_i, d_j)
    gdu_ref[...] += gram(d_i, u_j)
    gud_ref[...] += gram(u_i, d_j)
    dcov_ref[...] += gram(ur_i, dr_j) + gram(dr_i, ur_j)

    @pl.when(k == kt - 1)
    def _finalize():
        ctx_sq = 0.5 * (jnp.sum(guu_ref[...] * gdd_ref[...])
                        + jnp.sum(gdu_ref[...] * gud_ref[...]))
        spec_sq = 0.25 * jnp.sum(dcov_ref[...] * dcov_ref[...])
        lane = lax.broadcasted_iota(jnp.int32, (1, 8), 1)
        out_ref[0, 0, 0] = (jnp.where(lane == 0, ctx_sq, 0.0)
                            + jnp.where(lane == 1, spec_sq, 0.0))


def _mimic_components(teacher, student):
    """teacher/student: (N, T, D) native dtype -> (N, 8) f32 per-sample components
    [content, cosine, context_fro, local_mse, global_mse, temporal, spectral_fro, 0]."""
    N, T, D = teacher.shape
    dtype = teacher.dtype
    itemsize = jnp.dtype(dtype).itemsize
    chunk = max(1, D // 16)
    pb = _pick_gram_panel(D)
    pi = D // pb

    cap = _vmem_capacity_bytes()
    budget = int(0.85 * cap) - _HEADROOM

    # kernel-1 per-row / fixed VMEM cost (double-buffered blocks + f32 temporaries)
    per_row1 = 4 * D * itemsize + 4 * 128 * 4 + 8 * D * 4
    fixed1 = (2 * D * max(chunk, 128) * itemsize + 16 * max(D, 128) * 4
              + 16 * 128 * 4 + 16 * D * 4)
    rows1 = (budget - fixed1) // per_row1
    # kernel-2 per-row / fixed cost (4 panel blocks + inv rows + temporaries, ~8 PB^2 f32)
    per_row2 = 8 * pb * itemsize + 4 * 128 * 4 + 2 * (8 * 4 + 4 * itemsize) * pb
    fixed2 = 8 * pb * pb * 4 + 16 * 128 * 4
    rows2 = (budget - fixed2) // per_row2

    tile, t_pad = _pick_seq_tile(T, min(rows1, rows2))
    kt = t_pad // tile
    # The Gram kernel gets a larger tile (amortizes the PB^2 accumulator read-modify-write).
    mult = 1
    while kt % (2 * mult) == 0 and 2 * mult * tile <= min(rows2, 2048):
        mult *= 2
    tile2 = tile * mult
    kt2 = t_pad // tile2

    vmem1 = _vmem_limit(cap, fixed1 + tile * per_row1)
    vmem2 = _vmem_limit(cap, fixed2 + tile2 * per_row2)

    # Cheap XLA pre-pass: per-sample detached abs-mean scale ratio (replaces the (T,1)
    # per-token stat buffers / masked stores of the previous version).
    t_scale = jnp.mean(jnp.abs(teacher.astype(jnp.float32)), axis=(1, 2))
    s_scale = jnp.mean(jnp.abs(student.astype(jnp.float32)), axis=(1, 2))
    ratio = (t_scale / (s_scale + 1e-8)).reshape(N, 1, 1)

    if t_pad != T:
        pad = ((0, 0), (0, t_pad - T), (0, 0))
        teacher = jnp.pad(teacher, pad)
        student = jnp.pad(student, pad)

    chunk_mat = _chunk_average_matrix(D, dtype)

    sums, gsum, invt, invs = pl.pallas_call(
        functools.partial(_stream_kernel, true_t=T),
        out_shape=(jax.ShapeDtypeStruct((N, 1, 8), jnp.float32),
                   jax.ShapeDtypeStruct((N, 1, D), jnp.float32),
                   jax.ShapeDtypeStruct((N, t_pad, 1), jnp.float32),
                   jax.ShapeDtypeStruct((N, t_pad, 1), jnp.float32)),
        grid=(N, kt),
        in_specs=[
            pl.BlockSpec((1, tile, D), lambda n, k: (n, k, 0)),
            pl.BlockSpec((1, tile, D), lambda n, k: (n, k, 0)),
            pl.BlockSpec((D, chunk), lambda n, k: (0, 0)),
            pl.BlockSpec((1, 1, 1), lambda n, k: (n, 0, 0)),
        ],
        out_specs=(
            pl.BlockSpec((1, 1, 8), lambda n, k: (n, 0, 0)),
            pl.BlockSpec((1, 1, D), lambda n, k: (n, 0, 0)),
            pl.BlockSpec((1, tile, 1), lambda n, k: (n, k, 0)),
            pl.BlockSpec((1, tile, 1), lambda n, k: (n, k, 0)),
        ),
        scratch_shapes=[pltpu.VMEM((1, D), jnp.float32),
                        pltpu.VMEM((1, D), jnp.float32)],
        compiler_params=pltpu.CompilerParams(
            dimension_semantics=("parallel", "arbitrary"),
            vmem_limit_bytes=vmem1),
    )(teacher, student, chunk_mat, ratio)

    partial = pl.pallas_call(
        _gram_kernel,
        out_shape=jax.ShapeDtypeStruct((N, pi, pi, 1, 8), jnp.float32),
        grid=(N, pi, pi, kt2),
        in_specs=[
            pl.BlockSpec((1, tile2, pb), lambda n, i, j, k: (n, k, i)),
            pl.BlockSpec((1, tile2, pb), lambda n, i, j, k: (n, k, i)),
            pl.BlockSpec((1, tile2, pb), lambda n, i, j, k: (n, k, j)),
            pl.BlockSpec((1, tile2, pb), lambda n, i, j, k: (n, k, j)),
            pl.BlockSpec((1, tile2, 1), lambda n, i, j, k: (n, k, 0)),
            pl.BlockSpec((1, tile2, 1), lambda n, i, j, k: (n, k, 0)),
        ],
        out_specs=pl.BlockSpec((1, 1, 1, 1, 8), lambda n, i, j, k: (n, i, j, 0, 0)),
        scratch_shapes=[pltpu.VMEM((pb, pb), jnp.float32) for _ in range(5)],
        compiler_params=pltpu.CompilerParams(
            dimension_semantics=("parallel", "parallel", "parallel", "arbitrary"),
            vmem_limit_bytes=vmem2),
    )(teacher, student, teacher, student, invt, invs)

    s = sums[:, 0, :]
    content = s[:, 0] / T
    cosine = s[:, 1] / T
    local = s[:, 2] / float(T * chunk)
    temporal = 1.0 - s[:, 3] * lax.rsqrt(jnp.maximum(s[:, 4] * s[:, 5], 1e-16))
    gmean = gsum[:, 0, :] / T
    global_ = jnp.mean(gmean * gmean, axis=-1)
    p = jnp.sum(partial[:, :, :, 0, :], axis=(1, 2))
    context = jnp.sqrt(jnp.maximum(p[:, 0], 0.0))
    spectral = jnp.sqrt(jnp.maximum(p[:, 1], 0.0)) / T
    return jnp.stack([content, cosine, context, local, global_, temporal, spectral,
                      jnp.zeros_like(content)], axis=-1)


def _combine_components(comps, layer_idx, n_layer, seq_len, hidden_dim):
    """Combine batch-averaged (…, 8) components with the PyTorch weighting."""
    chunk = max(1, hidden_dim // 16)
    content = comps[..., 0] * hidden_dim ** (-0.5)
    cosine = comps[..., 1]
    context = comps[..., 2] / (seq_len ** 2)
    local = comps[..., 3] * chunk ** 0.5
    global_ = comps[..., 4] * hidden_dim ** 0.5
    temporal = comps[..., 5] if seq_len > 1 else jnp.zeros_like(comps[..., 5])
    spectral = comps[..., 6] / hidden_dim

    rel = jnp.asarray(layer_idx, jnp.float32) / n_layer
    context_importance = 1.0 + 0.5 * rel
    content_importance = 1.0 - 0.3 * rel
    # getattr defaults in the reference: local 0.5, global 0.5, temporal 1.0, spectral 0.3
    return (content_importance * content + 2.0 * cosine + context_importance * context
            + 0.5 * local + 0.5 * global_ + 1.0 * temporal + 0.3 * spectral)


@functools.partial(jax.jit, static_argnames=("layer_idx", "n_layer"))
def comprehensive_attention_mimicking_loss(teacher_hs, student_hs, layer_idx=0, n_layer=32):
    """Single-layer JAX/Pallas port of AttentionWrapper.comprehensive_attention_mimicking_loss."""
    B, T, D = teacher_hs.shape
    comps = _mimic_components(teacher_hs, student_hs).mean(axis=0)
    return _combine_components(comps, layer_idx, n_layer, T, D)


@functools.partial(jax.jit, static_argnames=("n_layer",))
def hybrid_mimicking_losses(teacher_hs, student_hs, n_layer):
    """All layers fused (sample axis = layers x batch).  teacher_hs/student_hs: (L, B, T, D)."""
    L, B, T, D = teacher_hs.shape
    comps = _mimic_components(teacher_hs.reshape(L * B, T, D),
                              student_hs.reshape(L * B, T, D))
    comps = comps.reshape(L, B, 8).mean(axis=1)                 # batch-mean per layer
    return _combine_components(comps, jnp.arange(L), n_layer, T, D)


def attention_wrapper_forward(teacher_hidden_states, student_hidden_states, layer_idx, n_layer):
    """Mirrors AttentionWrapper.forward's stage-4 return: (teacher_out, special_attn_loss)."""
    loss = comprehensive_attention_mimicking_loss(
        teacher_hidden_states, student_hidden_states, layer_idx=layer_idx, n_layer=n_layer)
    return teacher_hidden_states, loss


def hybrid_model_forward(teacher_hs_per_layer, student_hs_per_layer, n_layer):
    """HybridModel.forward analogue: per-layer mimicking losses from the fused kernels."""
    losses = hybrid_mimicking_losses(teacher_hs_per_layer, student_hs_per_layer,
                                     n_layer=n_layer)
    return teacher_hs_per_layer[-1], losses


def _reference_loss(t, s, layer_idx, n_layer):
    """Pure-JAX (XLA) port of the PyTorch loss, used only to sanity-check the kernels."""
    t = t.astype(jnp.float32)
    s = s.astype(jnp.float32)
    B, T, D = t.shape
    t_scale = jnp.mean(jnp.abs(t), axis=(1, 2), keepdims=True)
    s_scale = jnp.mean(jnp.abs(s), axis=(1, 2), keepdims=True)
    ratio = t_scale / (s_scale + 1e-8)
    content = jnp.mean(jnp.sqrt(jnp.sum((t - s * ratio) ** 2, axis=-1))) * D ** (-0.5)
    w12 = jnp.sum(t * s, -1)
    w1 = jnp.sum(t * t, -1)
    w2 = jnp.sum(s * s, -1)
    cosine = jnp.mean(1.0 - w12 / jnp.sqrt(jnp.maximum(w1 * w2, 1e-16)))
    tn = t / jnp.maximum(jnp.sqrt(w1)[..., None], 1e-12)
    sn = s / jnp.maximum(jnp.sqrt(w2)[..., None], 1e-12)
    gt = jnp.einsum("btd,bud->btu", tn, tn)
    gs = jnp.einsum("btd,bud->btu", sn, sn)
    context = jnp.mean(jnp.sqrt(jnp.sum((gt - gs) ** 2, axis=(1, 2)))) / T ** 2
    chunk = max(1, D // 16)
    nch = D // chunk
    lt = t[..., :nch * chunk].reshape(B, T, nch, chunk).mean(axis=2)
    ls = s[..., :nch * chunk].reshape(B, T, nch, chunk).mean(axis=2)
    local = jnp.mean((lt - ls) ** 2) * chunk ** 0.5
    global_ = jnp.mean((t.mean(axis=1) - s.mean(axis=1)) ** 2) * D ** 0.5
    td = (t[:, 1:] - t[:, :-1]).reshape(B, -1)
    sd = (s[:, 1:] - s[:, :-1]).reshape(B, -1)
    wd = jnp.sum(td * sd, -1)
    temporal = jnp.mean(1.0 - wd / jnp.sqrt(
        jnp.maximum(jnp.sum(td * td, -1) * jnp.sum(sd * sd, -1), 1e-16)))
    tc = jnp.einsum("btd,bte->bde", t, t) / T
    sc = jnp.einsum("btd,bte->bde", s, s) / T
    spectral = jnp.mean(jnp.sqrt(jnp.sum((tc - sc) ** 2, axis=(1, 2)))) / D
    rel = layer_idx / n_layer
    return ((1.0 - 0.3 * rel) * content + 2.0 * cosine + (1.0 + 0.5 * rel) * context
            + 0.5 * local + 0.5 * global_ + 1.0 * temporal + 0.3 * spectral)


if __name__ == "__main__":
    B, T, D = 2, 8, 32      # batch, seq, hidden
    n_layer = 4

    key = jax.random.PRNGKey(0)
    k_t, k_s = jax.random.split(key)
    teacher32 = jax.random.normal(k_t, (n_layer, B, T, D), dtype=jnp.float32)
    student32 = 0.7 * teacher32 + 0.3 * jax.random.normal(k_s, (n_layer, B, T, D),
                                                          dtype=jnp.float32)
    # Hidden states stay in the native activation dtype (bf16); the kernels consume them
    # directly (no host-side f32 upcast).
    teacher = teacher32.astype(jnp.bfloat16)
    student = student32.astype(jnp.bfloat16)

    last_hidden, layer_losses = hybrid_model_forward(teacher, student, n_layer)
    last_hidden = jax.block_until_ready(last_hidden)
    layer_losses = jax.block_until_ready(layer_losses)

    ref_losses = jnp.stack([_reference_loss(teacher[l], student[l], l, n_layer)
                            for l in range(n_layer)])

    finite = bool(jnp.all(jnp.isfinite(layer_losses)))
    close = bool(jnp.allclose(layer_losses, ref_losses, rtol=5e-2, atol=1e-2))
    if finite and close:
        print("KERNEL_OK")
    else:
        raise RuntimeError(
            f"kernel/reference mismatch or non-finite: kernel={layer_losses} ref={ref_losses}")
</pallas_src>

<mosaic_0001>
module attributes {stable_mosaic.version = 11 : i64} {
  func.func @_stream_kernel(%arg0: i32, %arg1: i32, %arg2: memref<1x8x32xbf16, #tpu.memory_space<vmem>>, %arg3: memref<1x8x32xbf16, #tpu.memory_space<vmem>>, %arg4: memref<32x2xbf16, #tpu.memory_space<vmem>>, %arg5: memref<1x1x1xf32, #tpu.memory_space<vmem>>, %arg6: memref<1x1x8xf32, #tpu.memory_space<vmem>>, %arg7: memref<1x1x32xf32, #tpu.memory_space<vmem>>, %arg8: memref<1x8x1xf32, #tpu.memory_space<vmem>>, %arg9: memref<1x8x1xf32, #tpu.memory_space<vmem>>, %arg10: memref<1x32xf32, #tpu.memory_space<vmem>>, %arg11: memref<1x32xf32, #tpu.memory_space<vmem>>) attributes {dimension_semantics = [#tpu.dimension_semantics<parallel>, #tpu.dimension_semantics<arbitrary>], iteration_bounds = array<i64: 8, 1>, scalar_prefetch = 0 : i64, scratch_operands = 2 : i64, tpu.core_type = #tpu.core_type<tc>, window_params = [{transform_indices = @transform_0, window_bounds = array<i64: 1, 8, 32>}, {transform_indices = @transform_1, window_bounds = array<i64: 1, 8, 32>}, {pipeline_mode = #tpu.pipeline_mode<synchronous>, transform_indices = @transform_2, window_bounds = array<i64: 32, 2>}, {transform_indices = @transform_3, window_bounds = array<i64: 1, 1, 1>}, {transform_indices = @transform_4, window_bounds = array<i64: 1, 1, 8>}, {transform_indices = @transform_5, window_bounds = array<i64: 1, 1, 32>}, {transform_indices = @transform_6, window_bounds = array<i64: 1, 8, 1>}, {transform_indices = @transform_7, window_bounds = array<i64: 1, 8, 1>}]} {
    %c0_i32 = arith.constant 0 : i32
    %0 = arith.cmpi eq, %arg1, %c0_i32 : i32
    %1 = arith.extui %0 : i1 to i32
    %c0_i32_0 = arith.constant 0 : i32
    %2 = arith.cmpi ne, %1, %c0_i32_0 : i32
    scf.if %2 {
      %cst_70 = arith.constant 0.000000e+00 : f32
      %192 = vector.broadcast %cst_70 : f32 to vector<1x1x8xf32>
      %c0_71 = arith.constant 0 : index
      %c0_72 = arith.constant 0 : index
      %c0_73 = arith.constant 0 : index
      %193 = vector.load %arg6[%c0_71, %c0_72, %c0_73] : memref<1x1x8xf32, #tpu.memory_space<vmem>>, vector<1x1x8xf32>
      tpu.vector_store %arg6[%c0_71, %c0_72, %c0_73], %192 {strides = array<i32>} : memref<1x1x8xf32, #tpu.memory_space<vmem>>, vector<1x1x8xf32>,
      %cst_74 = arith.constant 0.000000e+00 : f32
      %194 = vector.broadcast %cst_74 : f32 to vector<1x1x32xf32>
      %c0_75 = arith.constant 0 : index
      %c0_76 = arith.constant 0 : index
      %c0_77 = arith.constant 0 : index
      %195 = vector.load %arg7[%c0_75, %c0_76, %c0_77] : memref<1x1x32xf32, #tpu.memory_space<vmem>>, vector<1x1x32xf32>
      tpu.vector_store %arg7[%c0_75, %c0_76, %c0_77], %194 {strides = array<i32>} : memref<1x1x32xf32, #tpu.memory_space<vmem>>, vector<1x1x32xf32>,
      %cst_78 = arith.constant 0.000000e+00 : f32
      %196 = vector.broadcast %cst_78 : f32 to vector<1x32xf32>
      %c0_79 = arith.constant 0 : index
      %c0_80 = arith.constant 0 : index
      %197 = vector.load %arg10[%c0_79, %c0_80] : memref<1x32xf32, #tpu.memory_space<vmem>>, vector<1x32xf32>
      tpu.vector_store %arg10[%c0_79, %c0_80], %196 {strides = array<i32>} : memref<1x32xf32, #tpu.memory_space<vmem>>, vector<1x32xf32>,
      %cst_81 = arith.constant 0.000000e+00 : f32
      %198 = vector.broadcast %cst_81 : f32 to vector<1x32xf32>
      %c0_82 = arith.constant 0 : index
      %c0_83 = arith.constant 0 : index
      %199 = vector.load %arg11[%c0_82, %c0_83] : memref<1x32xf32, #tpu.memory_space<vmem>>, vector<1x32xf32>
      tpu.vector_store %arg11[%c0_82, %c0_83], %198 {strides = array<i32>} : memref<1x32xf32, #tpu.memory_space<vmem>>, vector<1x32xf32>,
    } else {
    }
    %c0 = arith.constant 0 : index
    %c0_1 = arith.constant 0 : index
    %c0_2 = arith.constant 0 : index
    %3 = vector.load %arg2[%c0, %c0_1, %c0_2] : memref<1x8x32xbf16, #tpu.memory_space<vmem>>, vector<1x8x32xbf16>
    %4 = vector.shape_cast %3 : vector<1x8x32xbf16> to vector<8x32xbf16>
    %c0_3 = arith.constant 0 : index
    %c0_4 = arith.constant 0 : index
    %c0_5 = arith.constant 0 : index
    %5 = vector.load %arg3[%c0_3, %c0_4, %c0_5] : memref<1x8x32xbf16, #tpu.memory_space<vmem>>, vector<1x8x32xbf16>
    %6 = vector.shape_cast %5 : vector<1x8x32xbf16> to vector<8x32xbf16>
    %7 = arith.extf %4 : vector<8x32xbf16> to vector<8x32xf32>
    %8 = arith.extf %6 : vector<8x32xbf16> to vector<8x32xf32>
    %9 = arith.mulf %7, %7 : vector<8x32xf32>
    %cst = arith.constant dense<0.000000e+00> : vector<8xf32>
    %10 = vector.multi_reduction <add>, %9, %cst [1] : vector<8x32xf32> to vector<8xf32>
    %11 = vector.shape_cast %10 : vector<8xf32> to vector<8x1xf32>
    %12 = arith.mulf %7, %8 : vector<8x32xf32>
    %cst_6 = arith.constant dense<0.000000e+00> : vector<8xf32>
    %13 = vector.multi_reduction <add>, %12, %cst_6 [1] : vector<8x32xf32> to vector<8xf32>
    %14 = vector.shape_cast %13 : vector<8xf32> to vector<8x1xf32>
    %15 = arith.mulf %8, %8 : vector<8x32xf32>
    %cst_7 = arith.constant dense<0.000000e+00> : vector<8xf32>
    %16 = vector.multi_reduction <add>, %15, %cst_7 [1] : vector<8x32xf32> to vector<8xf32>
    %17 = vector.shape_cast %16 : vector<8xf32> to vector<8x1xf32>
    %18 = math.sqrt %11 : vector<8x1xf32>
    %cst_8 = arith.constant 9.99999996E-13 : f32
    %19 = vector.broadcast %cst_8 : f32 to vector<8x1xf32>
    %20 = arith.maximumf %18, %19 : vector<8x1xf32>
    %cst_9 = arith.constant 1.000000e+00 : f32
    %21 = vector.broadcast %cst_9 : f32 to vector<8x1xf32>
    %22 = arith.divf %21, %20 : vector<8x1xf32>
    %c0_10 = arith.constant 0 : index
    %c0_11 = arith.constant 0 : index
    %c0_12 = arith.constant 0 : index
    %23 = vector.load %arg8[%c0_10, %c0_11, %c0_12] : memref<1x8x1xf32, #tpu.memory_space<vmem>>, vector<1x8x1xf32>
    %24 = vector.shape_cast %23 : vector<1x8x1xf32> to vector<8x1xf32>
    %25 = vector.shape_cast %22 : vector<8x1xf32> to vector<1x8x1xf32>
    tpu.vector_store %arg8[%c0_10, %c0_11, %c0_12], %25 {strides = array<i32>} : memref<1x8x1xf32, #tpu.memory_space<vmem>>, vector<1x8x1xf32>,
    %26 = math.sqrt %17 : vector<8x1xf32>
    %cst_13 = arith.constant 9.99999996E-13 : f32
    %27 = vector.broadcast %cst_13 : f32 to vector<8x1xf32>
    %28 = arith.maximumf %26, %27 : vector<8x1xf32>
    %cst_14 = arith.constant 1.000000e+00 : f32
    %29 = vector.broadcast %cst_14 : f32 to vector<8x1xf32>
    %30 = arith.divf %29, %28 : vector<8x1xf32>
    %c0_15 = arith.constant 0 : index
    %c0_16 = arith.constant 0 : index
    %c0_17 = arith.constant 0 : index
    %31 = vector.load %arg9[%c0_15, %c0_16, %c0_17] : memref<1x8x1xf32, #tpu.memory_space<vmem>>, vector<1x8x1xf32>
    %32 = vector.shape_cast %31 : vector<1x8x1xf32> to vector<8x1xf32>
    %33 = vector.shape_cast %30 : vector<8x1xf32> to vector<1x8x1xf32>
    tpu.vector_store %arg9[%c0_15, %c0_16, %c0_17], %33 {strides = array<i32>} : memref<1x8x1xf32, #tpu.memory_space<vmem>>, vector<1x8x1xf32>,
    %34 = tpu.iota {dimensions = array<i32: 0>} : vector<8x1xi32>
    %c8_i32 = arith.constant 8 : i32
    %35 = arith.muli %arg1, %c8_i32 : i32
    %36 = vector.broadcast %35 : i32 to vector<8x1xi32>
    %37 = arith.addi %36, %34 : vector<8x1xi32>
    %c8_i32_18 = arith.constant 8 : i32
    %38 = vector.broadcast %c8_i32_18 : i32 to vector<8x1xi32>
    %39 = arith.cmpi slt, %37, %38 : vector<8x1xi32>
    %40 = arith.extui %39 : vector<8x1xi1> to vector<8x1xi32>
    %41 = arith.sitofp %40 : vector<8x1xi32> to vector<8x1xf32>
    %42 = arith.mulf %11, %17 : vector<8x1xf32>
    %cst_19 = arith.constant 1.000000e-16 : f32
    %43 = vector.broadcast %cst_19 : f32 to vector<8x1xf32>
    %44 = arith.maximumf %42, %43 : vector<8x1xf32>
    %45 = math.rsqrt %44 : vector<8x1xf32>
    %46 = arith.mulf %14, %45 : vector<8x1xf32>
    %cst_20 = arith.constant 1.000000e+00 : f32
    %47 = vector.broadcast %cst_20 : f32 to vector<8x1xf32>
    %48 = arith.subf %47, %46 : vector<8x1xf32>
    %49 = arith.mulf %41, %48 : vector<8x1xf32>
    %50 = vector.shape_cast %49 : vector<8x1xf32> to vector<1x8x1xf32>
    %cst_21 = arith.constant dense<0.000000e+00> : vector<1xf32>
    %51 = vector.multi_reduction <add>, %50, %cst_21 [1, 2] : vector<1x8x1xf32> to vector<1xf32>
    %52 = vector.shape_cast %51 : vector<1xf32> to vector<1x1x1xf32>
    %53 = vector.extract %52[0, 0, 0] : f32 from vector<1x1x1xf32>
    %c0_22 = arith.constant 0 : index
    %c0_23 = arith.constant 0 : index
    %c0_24 = arith.constant 0 : index
    %54 = vector.load %arg5[%c0_22, %c0_23, %c0_24] : memref<1x1x1xf32, #tpu.memory_space<vmem>>, vector<1x1x1xf32>
    %55 = vector.shape_cast %54 : vector<1x1x1xf32> to vector<1x1xf32>
    %56 = vector.broadcast %55 : vector<1x1xf32> to vector<8x32xf32>
    %57 = arith.mulf %56, %8 : vector<8x32xf32>
    %58 = arith.subf %7, %57 : vector<8x32xf32>
    %59 = arith.mulf %58, %58 : vector<8x32xf32>
    %cst_25 = arith.constant dense<0.000000e+00> : vector<8xf32>
    %60 = vector.multi_reduction <add>, %59, %cst_25 [1] : vector<8x32xf32> to vector<8xf32>
    %61 = vector.shape_cast %60 : vector<8xf32> to vector<8x1xf32>
    %62 = math.sqrt %61 : vector<8x1xf32>
    %63 = vector.shape_cast %62 : vector<8x1xf32> to vector<1x8x1xf32>
    %cst_26 = arith.constant dense<0.000000e+00> : vector<1xf32>
    %64 = vector.multi_reduction <add>, %63, %cst_26 [1, 2] : vector<1x8x1xf32> to vector<1xf32>
    %65 = vector.shape_cast %64 : vector<1xf32> to vector<1x1x1xf32>
    %66 = vector.extract %65[0, 0, 0] : f32 from vector<1x1x1xf32>
    %67 = arith.subf %7, %8 : vector<8x32xf32>
    %c0_27 = arith.constant 0 : index
    %c0_28 = arith.constant 0 : index
    %c0_29 = arith.constant 0 : index
    %68 = vector.load %arg7[%c0_27, %c0_28, %c0_29] : memref<1x1x32xf32, #tpu.memory_space<vmem>>, vector<1x1x32xf32>
    %69 = vector.shape_cast %68 : vector<1x1x32xf32> to vector<1x32xf32>
    %cst_30 = arith.constant dense<0.000000e+00> : vector<32xf32>
    %70 = vector.multi_reduction <add>, %67, %cst_30 [0] : vector<8x32xf32> to vector<32xf32>
    %71 = vector.shape_cast %70 : vector<32xf32> to vector<1x32xf32>
    %72 = arith.addf %69, %71 : vector<1x32xf32>
    %c0_31 = arith.constant 0 : index
    %c0_32 = arith.constant 0 : index
    %c0_33 = arith.constant 0 : index
    %73 = vector.load %arg7[%c0_31, %c0_32, %c0_33] : memref<1x1x32xf32, #tpu.memory_space<vmem>>, vector<1x1x32xf32>
    %74 = vector.shape_cast %73 : vector<1x1x32xf32> to vector<1x32xf32>
    %75 = vector.shape_cast %72 : vector<1x32xf32> to vector<1x1x32xf32>
    tpu.vector_store %arg7[%c0_31, %c0_32, %c0_33], %75 {strides = array<i32>} : memref<1x1x32xf32, #tpu.memory_space<vmem>>, vector<1x1x32xf32>,
    %76 = arith.truncf %67 : vector<8x32xf32> to vector<8x32xbf16>
    %c0_34 = arith.constant 0 : index
    %c0_35 = arith.constant 0 : index
    %77 = vector.load %arg4[%c0_34, %c0_35] : memref<32x2xbf16, #tpu.memory_space<vmem>>, vector<32x2xbf16>
    %cst_36 = arith.constant dense<0.000000e+00> : vector<8x2xf32>
    %78 = tpu.matmul %76, %77, %cst_36 {dimension_numbers = #tpu.dot_dimension_numbers<[1], [0], [0], [1], [0, 0, 1, 1], [], []>} : vector<8x32xbf16>, vector<32x2xbf16>, vector<8x2xf32> -> vector<8x2xf32>
    %79 = arith.mulf %78, %78 : vector<8x2xf32>
    %80 = vector.shape_cast %79 : vector<8x2xf32> to vector<1x8x2xf32>
    %cst_37 = arith.constant dense<0.000000e+00> : vector<1xf32>
    %81 = vector.multi_reduction <add>, %80, %cst_37 [1, 2] : vector<1x8x2xf32> to vector<1xf32>
    %82 = vector.shape_cast %81 : vector<1xf32> to vector<1x1x1xf32>
    %83 = vector.extract %82[0, 0, 0] : f32 from vector<1x1x1xf32>
    %c7_i32 = arith.constant 7 : i32
    %84 = vector.broadcast %c7_i32 : i32 to vector<8x1xi32>
    %85 = arith.cmpi slt, %34, %84 : vector<8x1xi32>
    %c1_i32 = arith.constant 1 : i32
    %86 = vector.broadcast %c1_i32 : i32 to vector<8x1xi32>
    %87 = arith.addi %37, %86 : vector<8x1xi32>
    %c8_i32_38 = arith.constant 8 : i32
    %88 = vector.broadcast %c8_i32_38 : i32 to vector<8x1xi32>
    %89 = arith.cmpi slt, %87, %88 : vector<8x1xi32>
    %90 = arith.andi %85, %89 : vector<8x1xi1>
    %91 = arith.extui %90 : vector<8x1xi1> to vector<8x1xi32>
    %92 = arith.sitofp %91 : vector<8x1xi32> to vector<8x1xf32>
    %c7_i32_39 = arith.constant 7 : i32
    %93 = tpu.dynamic_rotate %7 by %c7_i32_39 dim 0 : vector<8x32xf32>, i32 -> vector<8x32xf32>
    %94 = arith.subf %93, %7 : vector<8x32xf32>
    %95 = vector.broadcast %92 : vector<8x1xf32> to vector<8x32xf32>
    %96 = arith.mulf %95, %94 : vector<8x32xf32>
    %c7_i32_40 = arith.constant 7 : i32
    %97 = tpu.dynamic_rotate %8 by %c7_i32_40 dim 0 : vector<8x32xf32>, i32 -> vector<8x32xf32>
    %98 = arith.subf %97, %8 : vector<8x32xf32>
    %99 = vector.broadcast %92 : vector<8x1xf32> to vector<8x32xf32>
    %100 = arith.mulf %99, %98 : vector<8x32xf32>
    %101 = arith.mulf %96, %100 : vector<8x32xf32>
    %102 = vector.shape_cast %101 : vector<8x32xf32> to vector<1x8x32xf32>
    %cst_41 = arith.constant dense<0.000000e+00> : vector<1xf32>
    %103 = vector.multi_reduction <add>, %102, %cst_41 [1, 2] : vector<1x8x32xf32> to vector<1xf32>
    %104 = vector.shape_cast %103 : vector<1xf32> to vector<1x1x1xf32>
    %105 = vector.extract %104[0, 0, 0] : f32 from vector<1x1x1xf32>
    %106 = arith.mulf %96, %96 : vector<8x32xf32>
    %107 = vector.shape_cast %106 : vector<8x32xf32> to vector<1x8x32xf32>
    %cst_42 = arith.constant dense<0.000000e+00> : vector<1xf32>
    %108 = vector.multi_reduction <add>, %107, %cst_42 [1, 2] : vector<1x8x32xf32> to vector<1xf32>
    %109 = vector.shape_cast %108 : vector<1xf32> to vector<1x1x1xf32>
    %110 = vector.extract %109[0, 0, 0] : f32 from vector<1x1x1xf32>
    %111 = arith.mulf %100, %100 : vector<8x32xf32>
    %112 = vector.shape_cast %111 : vector<8x32xf32> to vector<1x8x32xf32>
    %cst_43 = arith.constant dense<0.000000e+00> : vector<1xf32>
    %113 = vector.multi_reduction <add>, %112, %cst_43 [1, 2] : vector<1x8x32xf32> to vector<1xf32>
    %114 = vector.shape_cast %113 : vector<1xf32> to vector<1x1x1xf32>
    %115 = vector.extract %114[0, 0, 0] : f32 from vector<1x1x1xf32>
    %116 = vector.extract_strided_slice %7 {offsets = [0, 0], sizes = [1, 32], strides = [1, 1]} : vector<8x32xf32> to vector<1x32xf32>
    %c0_44 = arith.constant 0 : index
    %c0_45 = arith.constant 0 : index
    %117 = vector.load %arg10[%c0_44, %c0_45] : memref<1x32xf32, #tpu.memory_space<vmem>>, vector<1x32xf32>
    %118 = arith.subf %116, %117 : vector<1x32xf32>
    %119 = vector.extract_strided_slice %8 {offsets = [0, 0], sizes = [1, 32], strides = [1, 1]} : vector<8x32xf32> to vector<1x32xf32>
    %c0_46 = arith.constant 0 : index
    %c0_47 = arith.constant 0 : index
    %120 = vector.load %arg11[%c0_46, %c0_47] : memref<1x32xf32, #tpu.memory_space<vmem>>, vector<1x32xf32>
    %121 = arith.subf %119, %120 : vector<1x32xf32>
    %c0_i32_48 = arith.constant 0 : i32
    %122 = arith.cmpi sgt, %arg1, %c0_i32_48 : i32
    %123 = arith.extui %122 : i1 to i32
    %124 = arith.sitofp %123 : i32 to f32
    %125 = arith.mulf %118, %121 : vector<1x32xf32>
    %126 = vector.shape_cast %125 : vector<1x32xf32> to vector<1x1x32xf32>
    %cst_49 = arith.constant dense<0.000000e+00> : vector<1xf32>
    %127 = vector.multi_reduction <add>, %126, %cst_49 [1, 2] : vector<1x1x32xf32> to vector<1xf32>
    %128 = vector.shape_cast %127 : vector<1xf32> to vector<1x1x1xf32>
    %129 = vector.extract %128[0, 0, 0] : f32 from vector<1x1x1xf32>
    %130 = arith.mulf %124, %129 : f32
    %131 = arith.addf %105, %130 : f32
    %132 = arith.mulf %118, %118 : vector<1x32xf32>
    %133 = vector.shape_cast %132 : vector<1x32xf32> to vector<1x1x32xf32>
    %cst_50 = arith.constant dense<0.000000e+00> : vector<1xf32>
    %134 = vector.multi_reduction <add>, %133, %cst_50 [1, 2] : vector<1x1x32xf32> to vector<1xf32>
    %135 = vector.shape_cast %134 : vector<1xf32> to vector<1x1x1xf32>
    %136 = vector.extract %135[0, 0, 0] : f32 from vector<1x1x1xf32>
    %137 = arith.mulf %124, %136 : f32
    %138 = arith.addf %110, %137 : f32
    %139 = arith.mulf %121, %121 : vector<1x32xf32>
    %140 = vector.shape_cast %139 : vector<1x32xf32> to vector<1x1x32xf32>
    %cst_51 = arith.constant dense<0.000000e+00> : vector<1xf32>
    %141 = vector.multi_reduction <add>, %140, %cst_51 [1, 2] : vector<1x1x32xf32> to vector<1xf32>
    %142 = vector.shape_cast %141 : vector<1xf32> to vector<1x1x1xf32>
    %143 = vector.extract %142[0, 0, 0] : f32 from vector<1x1x1xf32>
    %144 = arith.mulf %124, %143 : f32
    %145 = arith.addf %115, %144 : f32
    %146 = vector.extract_strided_slice %7 {offsets = [7, 0], sizes = [1, 32], strides = [1, 1]} : vector<8x32xf32> to vector<1x32xf32>
    %c0_52 = arith.constant 0 : index
    %c0_53 = arith.constant 0 : index
    %147 = vector.load %arg10[%c0_52, %c0_53] : memref<1x32xf32, #tpu.memory_space<vmem>>, vector<1x32xf32>
    tpu.vector_store %arg10[%c0_52, %c0_53], %146 {strides = array<i32>} : memref<1x32xf32, #tpu.memory_space<vmem>>, vector<1x32xf32>,
    %148 = vector.extract_strided_slice %8 {offsets = [7, 0], sizes = [1, 32], strides = [1, 1]} : vector<8x32xf32> to vector<1x32xf32>
    %c0_54 = arith.constant 0 : index
    %c0_55 = arith.constant 0 : index
    %149 = vector.load %arg11[%c0_54, %c0_55] : memref<1x32xf32, #tpu.memory_space<vmem>>, vector<1x32xf32>
    tpu.vector_store %arg11[%c0_54, %c0_55], %148 {strides = array<i32>} : memref<1x32xf32, #tpu.memory_space<vmem>>, vector<1x32xf32>,
    %150 = tpu.iota {dimensions = array<i32: 1>} : vector<1x8xi32>
    %c0_56 = arith.constant 0 : index
    %c0_57 = arith.constant 0 : index
    %c0_58 = arith.constant 0 : index
    %151 = vector.load %arg6[%c0_56, %c0_57, %c0_58] : memref<1x1x8xf32, #tpu.memory_space<vmem>>, vector<1x1x8xf32>
    %152 = vector.shape_cast %151 : vector<1x1x8xf32> to vector<1x8xf32>
    %c0_i32_59 = arith.constant 0 : i32
    %153 = vector.broadcast %c0_i32_59 : i32 to vector<1x8xi32>
    %154 = arith.cmpi eq, %150, %153 : vector<1x8xi32>
    %cst_60 = arith.constant 0.000000e+00 : f32
    %155 = vector.broadcast %66 : f32 to vector<1x8xf32>
    %156 = vector.broadcast %cst_60 : f32 to vector<1x8xf32>
    %157 = arith.select %154, %155, %156 : vector<1x8xi1>, vector<1x8xf32>
    %c1_i32_61 = arith.constant 1 : i32
    %158 = vector.broadcast %c1_i32_61 : i32 to vector<1x8xi32>
    %159 = arith.cmpi eq, %150, %158 : vector<1x8xi32>
    %cst_62 = arith.constant 0.000000e+00 : f32
    %160 = vector.broadcast %53 : f32 to vector<1x8xf32>
    %161 = vector.broadcast %cst_62 : f32 to vector<1x8xf32>
    %162 = arith.select %159, %160, %161 : vector<1x8xi1>, vector<1x8xf32>
    %163 = arith.addf %157, %162 : vector<1x8xf32>
    %c2_i32 = arith.constant 2 : i32
    %164 = vector.broadcast %c2_i32 : i32 to vector<1x8xi32>
    %165 = arith.cmpi eq, %150, %164 : vector<1x8xi32>
    %cst_63 = arith.constant 0.000000e+00 : f32
    %166 = vector.broadcast %83 : f32 to vector<1x8xf32>
    %167 = vector.broadcast %cst_63 : f32 to vector<1x8xf32>
    %168 = arith.select %165, %166, %167 : vector<1x8xi1>, vector<1x8xf32>
    %169 = arith.addf %163, %168 : vector<1x8xf32>
    %c3_i32 = arith.constant 3 : i32
    %170 = vector.broadcast %c3_i32 : i32 to vector<1x8xi32>
    %171 = arith.cmpi eq, %150, %170 : vector<1x8xi32>
    %cst_64 = arith.constant 0.000000e+00 : f32
    %172 = vector.broadcast %131 : f32 to vector<1x8xf32>
    %173 = vector.broadcast %cst_64 : f32 to vector<1x8xf32>
    %174 = arith.select %171, %172, %173 : vector<1x8xi1>, vector<1x8xf32>
    %175 = arith.addf %169, %174 : vector<1x8xf32>
    %c4_i32 = arith.constant 4 : i32
    %176 = vector.broadcast %c4_i32 : i32 to vector<1x8xi32>
    %177 = arith.cmpi eq, %150, %176 : vector<1x8xi32>
    %cst_65 = arith.constant 0.000000e+00 : f32
    %178 = vector.broadcast %138 : f32 to vector<1x8xf32>
    %179 = vector.broadcast %cst_65 : f32 to vector<1x8xf32>
    %180 = arith.select %177, %178, %179 : vector<1x8xi1>, vector<1x8xf32>
    %181 = arith.addf %175, %180 : vector<1x8xf32>
    %c5_i32 = arith.constant 5 : i32
    %182 = vector.broadcast %c5_i32 : i32 to vector<1x8xi32>
    %183 = arith.cmpi eq, %150, %182 : vector<1x8xi32>
    %cst_66 = arith.constant 0.000000e+00 : f32
    %184 = vector.broadcast %145 : f32 to vector<1x8xf32>
    %185 = vector.broadcast %cst_66 : f32 to vector<1x8xf32>
    %186 = arith.select %183, %184, %185 : vector<1x8xi1>, vector<1x8xf32>
    %187 = arith.addf %181, %186 : vector<1x8xf32>
    %188 = arith.addf %152, %187 : vector<1x8xf32>
    %c0_67 = arith.constant 0 : index
    %c0_68 = arith.constant 0 : index
    %c0_69 = arith.constant 0 : index
    %189 = vector.load %arg6[%c0_67, %c0_68, %c0_69] : memref<1x1x8xf32, #tpu.memory_space<vmem>>, vector<1x1x8xf32>
    %190 = vector.shape_cast %189 : vector<1x1x8xf32> to vector<1x8xf32>
    %191 = vector.shape_cast %188 : vector<1x8xf32> to vector<1x1x8xf32>
    tpu.vector_store %arg6[%c0_67, %c0_68, %c0_69], %191 {strides = array<i32>} : memref<1x1x8xf32, #tpu.memory_space<vmem>>, vector<1x1x8xf32>,
    return
  }
  func.func @transform_0(%arg0: i32, %arg1: i32) -> (i32, i32, i32) {
    %c0_i32 = arith.constant 0 : i32
    %c0_i32_0 = arith.constant 0 : i32
    return %arg0, %arg1, %c0_i32 : i32, i32, i32
  }
  func.func @transform_1(%arg0: i32, %arg1: i32) -> (i32, i32, i32) {
    %c0_i32 = arith.constant 0 : i32
    %c0_i32_0 = arith.constant 0 : i32
    return %arg0, %arg1, %c0_i32 : i32, i32, i32
  }
  func.func @transform_2(%arg0: i32, %arg1: i32) -> (i32, i32) {
    %c0_i32 = arith.constant 0 : i32
    %c0_i32_0 = arith.constant 0 : i32
    %c0_i32_1 = arith.constant 0 : i32
    return %c0_i32, %c0_i32_0 : i32, i32
  }
  func.func @transform_3(%arg0: i32, %arg1: i32) -> (i32, i32, i32) {
    %c0_i32 = arith.constant 0 : i32
    %c0_i32_0 = arith.constant 0 : i32
    %c0_i32_1 = arith.constant 0 : i32
    return %arg0, %c0_i32, %c0_i32_0 : i32, i32, i32
  }
  func.func @transform_4(%arg0: i32, %arg1: i32) -> (i32, i32, i32) {
    %c0_i32 = arith.constant 0 : i32
    %c0_i32_0 = arith.constant 0 : i32
    %c0_i32_1 = arith.constant 0 : i32
    return %arg0, %c0_i32, %c0_i32_0 : i32, i32, i32
  }
  func.func @transform_5(%arg0: i32, %arg1: i32) -> (i32, i32, i32) {
    %c0_i32 = arith.constant 0 : i32
    %c0_i32_0 = arith.constant 0 : i32
    %c0_i32_1 = arith.constant 0 : i32
    return %arg0, %c0_i32, %c0_i32_0 : i32, i32, i32
  }
  func.func @transform_6(%arg0: i32, %arg1: i32) -> (i32, i32, i32) {
    %c0_i32 = arith.constant 0 : i32
    %c0_i32_0 = arith.constant 0 : i32
    return %arg0, %arg1, %c0_i32 : i32, i32, i32
  }
  func.func @transform_7(%arg0: i32, %arg1: i32) -> (i32, i32, i32) {
    %c0_i32 = arith.constant 0 : i32
    %c0_i32_0 = arith.constant 0 : i32
    return %arg0, %arg1, %c0_i32 : i32, i32, i32
  }
}

module attributes {stable_mosaic.version = 11 : i64} {
  func.func @_gram_kernel(%arg0: i32, %arg1: i32, %arg2: i32, %arg3: i32, %arg4: memref<1x8x32xbf16, #tpu.memory_space<vmem>>, %arg5: memref<1x8x32xbf16, #tpu.memory_space<vmem>>, %arg6: memref<1x8x32xbf16, #tpu.memory_space<vmem>>, %arg7: memref<1x8x32xbf16, #tpu.memory_space<vmem>>, %arg8: memref<1x8x1xf32, #tpu.memory_space<vmem>>, %arg9: memref<1x8x1xf32, #tpu.memory_space<vmem>>, %arg10: memref<1x1x1x1x8xf32, #tpu.memory_space<vmem>>, %arg11: memref<32x32xf32, #tpu.memory_space<vmem>>, %arg12: memref<32x32xf32, #tpu.memory_space<vmem>>, %arg13: memref<32x32xf32, #tpu.memory_space<vmem>>, %arg14: memref<32x32xf32, #tpu.memory_space<vmem>>, %arg15: memref<32x32xf32, #tpu.memory_space<vmem>>) attributes {dimension_semantics = [#tpu.dimension_semantics<parallel>, #tpu.dimension_semantics<parallel>, #tpu.dimension_semantics<parallel>, #tpu.dimension_semantics<arbitrary>], iteration_bounds = array<i64: 8, 1, 1, 1>, scalar_prefetch = 0 : i64, scratch_operands = 5 : i64, tpu.core_type = #tpu.core_type<tc>, window_params = [{transform_indices = @transform_0, window_bounds = array<i64: 1, 8, 32>}, {transform_indices = @transform_1, window_bounds = array<i64: 1, 8, 32>}, {transform_indices = @transform_2, window_bounds = array<i64: 1, 8, 32>}, {transform_indices = @transform_3, window_bounds = array<i64: 1, 8, 32>}, {transform_indices = @transform_4, window_bounds = array<i64: 1, 8, 1>}, {transform_indices = @transform_5, window_bounds = array<i64: 1, 8, 1>}, {transform_indices = @transform_6, window_bounds = array<i64: 1, 1, 1, 1, 8>}]} {
    %c0_i32 = arith.constant 0 : i32
    %0 = arith.cmpi eq, %arg3, %c0_i32 : i32
    %1 = arith.extui %0 : i1 to i32
    %c0_i32_0 = arith.constant 0 : i32
    %2 = arith.cmpi ne, %1, %c0_i32_0 : i32
    scf.if %2 {
      %cst_45 = arith.constant 0.000000e+00 : f32
      %68 = vector.broadcast %cst_45 : f32 to vector<32x32xf32>
      %c0_46 = arith.constant 0 : index
      %c0_47 = arith.constant 0 : index
      %69 = vector.load %arg11[%c0_46, %c0_47] : memref<32x32xf32, #tpu.memory_space<vmem>>, vector<32x32xf32>
      tpu.vector_store %arg11[%c0_46, %c0_47], %68 {strides = array<i32>} : memref<32x32xf32, #tpu.memory_space<vmem>>, vector<32x32xf32>,
      %cst_48 = arith.constant 0.000000e+00 : f32
      %70 = vector.broadcast %cst_48 : f32 to vector<32x32xf32>
      %c0_49 = arith.constant 0 : index
      %c0_50 = arith.constant 0 : index
      %71 = vector.load %arg12[%c0_49, %c0_50] : memref<32x32xf32, #tpu.memory_space<vmem>>, vector<32x32xf32>
      tpu.vector_store %arg12[%c0_49, %c0_50], %70 {strides = array<i32>} : memref<32x32xf32, #tpu.memory_space<vmem>>, vector<32x32xf32>,
      %cst_51 = arith.constant 0.000000e+00 : f32
      %72 = vector.broadcast %cst_51 : f32 to vector<32x32xf32>
      %c0_52 = arith.constant 0 : index
      %c0_53 = arith.constant 0 : index
      %73 = vector.load %arg13[%c0_52, %c0_53] : memref<32x32xf32, #tpu.memory_space<vmem>>, vector<32x32xf32>
      tpu.vector_store %arg13[%c0_52, %c0_53], %72 {strides = array<i32>} : memref<32x32xf32, #tpu.memory_space<vmem>>, vector<32x32xf32>,
      %cst_54 = arith.constant 0.000000e+00 : f32
      %74 = vector.broadcast %cst_54 : f32 to vector<32x32xf32>
      %c0_55 = arith.constant 0 : index
      %c0_56 = arith.constant 0 : index
      %75 = vector.load %arg14[%c0_55, %c0_56] : memref<32x32xf32, #tpu.memory_space<vmem>>, vector<32x32xf32>
      tpu.vector_store %arg14[%c0_55, %c0_56], %74 {strides = array<i32>} : memref<32x32xf32, #tpu.memory_space<vmem>>, vector<32x32xf32>,
      %cst_57 = arith.constant 0.000000e+00 : f32
      %76 = vector.broadcast %cst_57 : f32 to vector<32x32xf32>
      %c0_58 = arith.constant 0 : index
      %c0_59 = arith.constant 0 : index
      %77 = vector.load %arg15[%c0_58, %c0_59] : memref<32x32xf32, #tpu.memory_space<vmem>>, vector<32x32xf32>
      tpu.vector_store %arg15[%c0_58, %c0_59], %76 {strides = array<i32>} : memref<32x32xf32, #tpu.memory_space<vmem>>, vector<32x32xf32>,
    } else {
    }
    %c0 = arith.constant 0 : index
    %c0_1 = arith.constant 0 : index
    %c0_2 = arith.constant 0 : index
    %3 = vector.load %arg8[%c0, %c0_1, %c0_2] : memref<1x8x1xf32, #tpu.memory_space<vmem>>, vector<1x8x1xf32>
    %4 = vector.shape_cast %3 : vector<1x8x1xf32> to vector<8x1xf32>
    %c0_3 = arith.constant 0 : index
    %c0_4 = arith.constant 0 : index
    %c0_5 = arith.constant 0 : index
    %5 = vector.load %arg9[%c0_3, %c0_4, %c0_5] : memref<1x8x1xf32, #tpu.memory_space<vmem>>, vector<1x8x1xf32>
    %6 = vector.shape_cast %5 : vector<1x8x1xf32> to vector<8x1xf32>
    %c0_6 = arith.constant 0 : index
    %c0_7 = arith.constant 0 : index
    %c0_8 = arith.constant 0 : index
    %7 = vector.load %arg4[%c0_6, %c0_7, %c0_8] : memref<1x8x32xbf16, #tpu.memory_space<vmem>>, vector<1x8x32xbf16>
    %8 = vector.shape_cast %7 : vector<1x8x32xbf16> to vector<8x32xbf16>
    %9 = arith.extf %8 : vector<8x32xbf16> to vector<8x32xf32>
    %c0_9 = arith.constant 0 : index
    %c0_10 = arith.constant 0 : index
    %c0_11 = arith.constant 0 : index
    %10 = vector.load %arg5[%c0_9, %c0_10, %c0_11] : memref<1x8x32xbf16, #tpu.memory_space<vmem>>, vector<1x8x32xbf16>
    %11 = vector.shape_cast %10 : vector<1x8x32xbf16> to vector<8x32xbf16>
    %12 = arith.extf %11 : vector<8x32xbf16> to vector<8x32xf32>
    %13 = vector.broadcast %4 : vector<8x1xf32> to vector<8x32xf32>
    %14 = arith.mulf %9, %13 : vector<8x32xf32>
    %15 = vector.broadcast %6 : vector<8x1xf32> to vector<8x32xf32>
    %16 = arith.mulf %12, %15 : vector<8x32xf32>
    %17 = arith.addf %14, %16 : vector<8x32xf32>
    %18 = arith.truncf %17 : vector<8x32xf32> to vector<8x32xbf16>
    %19 = arith.subf %14, %16 : vector<8x32xf32>
    %20 = arith.truncf %19 : vector<8x32xf32> to vector<8x32xbf16>
    %21 = arith.addf %9, %12 : vector<8x32xf32>
    %22 = arith.truncf %21 : vector<8x32xf32> to vector<8x32xbf16>
    %23 = arith.subf %9, %12 : vector<8x32xf32>
    %24 = arith.truncf %23 : vector<8x32xf32> to vector<8x32xbf16>
    %c0_12 = arith.constant 0 : index
    %c0_13 = arith.constant 0 : index
    %c0_14 = arith.constant 0 : index
    %25 = vector.load %arg6[%c0_12, %c0_13, %c0_14] : memref<1x8x32xbf16, #tpu.memory_space<vmem>>, vector<1x8x32xbf16>
    %26 = vector.shape_cast %25 : vector<1x8x32xbf16> to vector<8x32xbf16>
    %27 = arith.extf %26 : vector<8x32xbf16> to vector<8x32xf32>
    %c0_15 = arith.constant 0 : index
    %c0_16 = arith.constant 0 : index
    %c0_17 = arith.constant 0 : index
    %28 = vector.load %arg7[%c0_15, %c0_16, %c0_17] : memref<1x8x32xbf16, #tpu.memory_space<vmem>>, vector<1x8x32xbf16>
    %29 = vector.shape_cast %28 : vector<1x8x32xbf16> to vector<8x32xbf16>
    %30 = arith.extf %29 : vector<8x32xbf16> to vector<8x32xf32>
    %31 = vector.broadcast %4 : vector<8x1xf32> to vector<8x32xf32>
    %32 = arith.mulf %27, %31 : vector<8x32xf32>
    %33 = vector.broadcast %6 : vector<8x1xf32> to vector<8x32xf32>
    %34 = arith.mulf %30, %33 : vector<8x32xf32>
    %35 = arith.addf %32, %34 : vector<8x32xf32>
    %36 = arith.truncf %35 : vector<8x32xf32> to vector<8x32xbf16>
    %37 = arith.subf %32, %34 : vector<8x32xf32>
    %38 = arith.truncf %37 : vector<8x32xf32> to vector<8x32xbf16>
    %39 = arith.addf %27, %30 : vector<8x32xf32>
    %40 = arith.truncf %39 : vector<8x32xf32> to vector<8x32xbf16>
    %41 = arith.subf %27, %30 : vector<8x32xf32>
    %42 = arith.truncf %41 : vector<8x32xf32> to vector<8x32xbf16>
    %c0_18 = arith.constant 0 : index
    %c0_19 = arith.constant 0 : index
    %43 = vector.load %arg11[%c0_18, %c0_19] : memref<32x32xf32, #tpu.memory_space<vmem>>, vector<32x32xf32>
    %cst = arith.constant dense<0.000000e+00> : vector<32x32xf32>
    %44 = tpu.matmul %18, %36, %cst {dimension_numbers = #tpu.dot_dimension_numbers<[0], [0], [1], [1], [0, 1, 1, 1], [], []>} : vector<8x32xbf16>, vector<8x32xbf16>, vector<32x32xf32> -> vector<32x32xf32>
    %45 = arith.addf %43, %44 : vector<32x32xf32>
    %c0_20 = arith.constant 0 : index
    %c0_21 = arith.constant 0 : index
    %46 = vector.load %arg11[%c0_20, %c0_21] : memref<32x32xf32, #tpu.memory_space<vmem>>, vector<32x32xf32>
    tpu.vector_store %arg11[%c0_20, %c0_21], %45 {strides = array<i32>} : memref<32x32xf32, #tpu.memory_space<vmem>>, vector<32x32xf32>,
    %c0_22 = arith.constant 0 : index
    %c0_23 = arith.constant 0 : index
    %47 = vector.load %arg12[%c0_22, %c0_23] : memref<32x32xf32, #tpu.memory_space<vmem>>, vector<32x32xf32>
    %cst_24 = arith.constant dense<0.000000e+00> : vector<32x32xf32>
    %48 = tpu.matmul %20, %38, %cst_24 {dimension_numbers = #tpu.dot_dimension_numbers<[0], [0], [1], [1], [0, 1, 1, 1], [], []>} : vector<8x32xbf16>, vector<8x32xbf16>, vector<32x32xf32> -> vector<32x32xf32>
    %49 = arith.addf %47, %48 : vector<32x32xf32>
    %c0_25 = arith.constant 0 : index
    %c0_26 = arith.constant 0 : index
    %50 = vector.load %arg12[%c0_25, %c0_26] : memref<32x32xf32, #tpu.memory_space<vmem>>, vector<32x32xf32>
    tpu.vector_store %arg12[%c0_25, %c0_26], %49 {strides = array<i32>} : memref<32x32xf32, #tpu.memory_space<vmem>>, vector<32x32xf32>,
    %c0_27 = arith.constant 0 : index
    %c0_28 = arith.constant 0 : index
    %51 = vector.load %arg13[%c0_27, %c0_28] : memref<32x32xf32, #tpu.memory_space<vmem>>, vector<32x32xf32>
    %cst_29 = arith.constant dense<0.000000e+00> : vector<32x32xf32>
    %52 = tpu.matmul %20, %36, %cst_29 {dimension_numbers = #tpu.dot_dimension_numbers<[0], [0], [1], [1], [0, 1, 1, 1], [], []>} : vector<8x32xbf16>, vector<8x32xbf16>, vector<32x32xf32> -> vector<32x32xf32>
    %53 = arith.addf %51, %52 : vector<32x32xf32>
    %c0_30 = arith.constant 0 : index
    %c0_31 = arith.constant 0 : index
    %54 = vector.load %arg13[%c0_30, %c0_31] : memref<32x32xf32, #tpu.memory_space<vmem>>, vector<32x32xf32>
    tpu.vector_store %arg13[%c0_30, %c0_31], %53 {strides = array<i32>} : memref<32x32xf32, #tpu.memory_space<vmem>>, vector<32x32xf32>,
    %c0_32 = arith.constant 0 : index
    %c0_33 = arith.constant 0 : index
    %55 = vector.load %arg14[%c0_32, %c0_33] : memref<32x32xf32, #tpu.memory_space<vmem>>, vector<32x32xf32>
    %cst_34 = arith.constant dense<0.000000e+00> : vector<32x32xf32>
    %56 = tpu.matmul %18, %38, %cst_34 {dimension_numbers = #tpu.dot_dimension_numbers<[0], [0], [1], [1], [0, 1, 1, 1], [], []>} : vector<8x32xbf16>, vector<8x32xbf16>, vector<32x32xf32> -> vector<32x32xf32>
    %57 = arith.addf %55, %56 : vector<32x32xf32>
    %c0_35 = arith.constant 0 : index
    %c0_36 = arith.constant 0 : index
    %58 = vector.load %arg14[%c0_35, %c0_36] : memref<32x32xf32, #tpu.memory_space<vmem>>, vector<32x32xf32>
    tpu.vector_store %arg14[%c0_35, %c0_36], %57 {strides = array<i32>} : memref<32x32xf32, #tpu.memory_space<vmem>>, vector<32x32xf32>,
    %c0_37 = arith.constant 0 : index
    %c0_38 = arith.constant 0 : index
    %59 = vector.load %arg15[%c0_37, %c0_38] : memref<32x32xf32, #tpu.memory_space<vmem>>, vector<32x32xf32>
    %cst_39 = arith.constant dense<0.000000e+00> : vector<32x32xf32>
    %60 = tpu.matmul %22, %42, %cst_39 {dimension_numbers = #tpu.dot_dimension_numbers<[0], [0], [1], [1], [0, 1, 1, 1], [], []>} : vector<8x32xbf16>, vector<8x32xbf16>, vector<32x32xf32> -> vector<32x32xf32>
    %cst_40 = arith.constant dense<0.000000e+00> : vector<32x32xf32>
    %61 = tpu.matmul %24, %40, %cst_40 {dimension_numbers = #tpu.dot_dimension_numbers<[0], [0], [1], [1], [0, 1, 1, 1], [], []>} : vector<8x32xbf16>, vector<8x32xbf16>, vector<32x32xf32> -> vector<32x32xf32>
    %62 = arith.addf %60, %61 : vector<32x32xf32>
    %63 = arith.addf %59, %62 : vector<32x32xf32>
    %c0_41 = arith.constant 0 : index
    %c0_42 = arith.constant 0 : index
    %64 = vector.load %arg15[%c0_41, %c0_42] : memref<32x32xf32, #tpu.memory_space<vmem>>, vector<32x32xf32>
    tpu.vector_store %arg15[%c0_41, %c0_42], %63 {strides = array<i32>} : memref<32x32xf32, #tpu.memory_space<vmem>>, vector<32x32xf32>,
    %c0_i32_43 = arith.constant 0 : i32
    %65 = arith.cmpi eq, %arg3, %c0_i32_43 : i32
    %66 = arith.extui %65 : i1 to i32
    %c0_i32_44 = arith.constant 0 : i32
    %67 = arith.cmpi ne, %66, %c0_i32_44 : i32
    scf.if %67 {
      %c0_45 = arith.constant 0 : index
      %c0_46 = arith.constant 0 : index
      %68 = vector.load %arg11[%c0_45, %c0_46] : memref<32x32xf32, #tpu.memory_space<vmem>>, vector<32x32xf32>
      %c0_47 = arith.constant 0 : index
      %c0_48 = arith.constant 0 : index
      %69 = vector.load %arg12[%c0_47, %c0_48] : memref<32x32xf32, #tpu.memory_space<vmem>>, vector<32x32xf32>
      %70 = arith.mulf %68, %69 : vector<32x32xf32>
      %71 = vector.shape_cast %70 : vector<32x32xf32> to vector<1x32x32xf32>
      %cst_49 = arith.constant dense<0.000000e+00> : vector<1xf32>
      %72 = vector.multi_reduction <add>, %71, %cst_49 [1, 2] : vector<1x32x32xf32> to vector<1xf32>
      %73 = vector.shape_cast %72 : vector<1xf32> to vector<1x1x1xf32>
      %74 = vector.extract %73[0, 0, 0] : f32 from vector<1x1x1xf32>
      %c0_50 = arith.constant 0 : index
      %c0_51 = arith.constant 0 : index
      %75 = vector.load %arg13[%c0_50, %c0_51] : memref<32x32xf32, #tpu.memory_space<vmem>>, vector<32x32xf32>
      %c0_52 = arith.constant 0 : index
      %c0_53 = arith.constant 0 : index
      %76 = vector.load %arg14[%c0_52, %c0_53] : memref<32x32xf32, #tpu.memory_space<vmem>>, vector<32x32xf32>
      %77 = arith.mulf %75, %76 : vector<32x32xf32>
      %78 = vector.shape_cast %77 : vector<32x32xf32> to vector<1x32x32xf32>
      %cst_54 = arith.constant dense<0.000000e+00> : vector<1xf32>
      %79 = vector.multi_reduction <add>, %78, %cst_54 [1, 2] : vector<1x32x32xf32> to vector<1xf32>
      %80 = vector.shape_cast %79 : vector<1xf32> to vector<1x1x1xf32>
      %81 = vector.extract %80[0, 0, 0] : f32 from vector<1x1x1xf32>
      %82 = arith.addf %74, %81 : f32
      %cst_55 = arith.constant 5.000000e-01 : f32
      %83 = arith.mulf %cst_55, %82 : f32
      %c0_56 = arith.constant 0 : index
      %c0_57 = arith.constant 0 : index
      %84 = vector.load %arg15[%c0_56, %c0_57] : memref<32x32xf32, #tpu.memory_space<vmem>>, vector<32x32xf32>
      %c0_58 = arith.constant 0 : index
      %c0_59 = arith.constant 0 : index
      %85 = vector.load %arg15[%c0_58, %c0_59] : memref<32x32xf32, #tpu.memory_space<vmem>>, vector<32x32xf32>
      %86 = arith.mulf %84, %85 : vector<32x32xf32>
      %87 = vector.shape_cast %86 : vector<32x32xf32> to vector<1x32x32xf32>
      %cst_60 = arith.constant dense<0.000000e+00> : vector<1xf32>
      %88 = vector.multi_reduction <add>, %87, %cst_60 [1, 2] : vector<1x32x32xf32> to vector<1xf32>
      %89 = vector.shape_cast %88 : vector<1xf32> to vector<1x1x1xf32>
      %90 = vector.extract %89[0, 0, 0] : f32 from vector<1x1x1xf32>
      %cst_61 = arith.constant 2.500000e-01 : f32
      %91 = arith.mulf %cst_61, %90 : f32
      %92 = tpu.iota {dimensions = array<i32: 1>} : vector<1x8xi32>
      %c0_i32_62 = arith.constant 0 : i32
      %93 = vector.broadcast %c0_i32_62 : i32 to vector<1x8xi32>
      %94 = arith.cmpi eq, %92, %93 : vector<1x8xi32>
      %cst_63 = arith.constant 0.000000e+00 : f32
      %95 = vector.broadcast %83 : f32 to vector<1x8xf32>
      %96 = vector.broadcast %cst_63 : f32 to vector<1x8xf32>
      %97 = arith.select %94, %95, %96 : vector<1x8xi1>, vector<1x8xf32>
      %c1_i32 = arith.constant 1 : i32
      %98 = vector.broadcast %c1_i32 : i32 to vector<1x8xi32>
      %99 = arith.cmpi eq, %92, %98 : vector<1x8xi32>
      %cst_64 = arith.constant 0.000000e+00 : f32
      %100 = vector.broadcast %91 : f32 to vector<1x8xf32>
      %101 = vector.broadcast %cst_64 : f32 to vector<1x8xf32>
      %102 = arith.select %99, %100, %101 : vector<1x8xi1>, vector<1x8xf32>
      %103 = arith.addf %97, %102 : vector<1x8xf32>
      %c0_65 = arith.constant 0 : index
      %c0_66 = arith.constant 0 : index
      %c0_67 = arith.constant 0 : index
      %c0_68 = arith.constant 0 : index
      %c0_69 = arith.constant 0 : index
      %104 = vector.load %arg10[%c0_65, %c0_66, %c0_67, %c0_68, %c0_69] : memref<1x1x1x1x8xf32, #tpu.memory_space<vmem>>, vector<1x1x1x1x8xf32>
      %105 = vector.shape_cast %104 : vector<1x1x1x1x8xf32> to vector<1x8xf32>
      %106 = vector.shape_cast %103 : vector<1x8xf32> to vector<1x1x1x1x8xf32>
      tpu.vector_store %arg10[%c0_65, %c0_66, %c0_67, %c0_68, %c0_69], %106 {strides = array<i32>} : memref<1x1x1x1x8xf32, #tpu.memory_space<vmem>>, vector<1x1x1x1x8xf32>,
    } else {
    }
    return
  }
  func.func @transform_0(%arg0: i32, %arg1: i32, %arg2: i32, %arg3: i32) -> (i32, i32, i32) {
    %c0_i32 = arith.constant 0 : i32
    return %arg0, %arg3, %arg1 : i32, i32, i32
  }
  func.func @transform_1(%arg0: i32, %arg1: i32, %arg2: i32, %arg3: i32) -> (i32, i32, i32) {
    %c0_i32 = arith.constant 0 : i32
    return %arg0, %arg3, %arg1 : i32, i32, i32
  }
  func.func @transform_2(%arg0: i32, %arg1: i32, %arg2: i32, %arg3: i32) -> (i32, i32, i32) {
    %c0_i32 = arith.constant 0 : i32
    return %arg0, %arg3, %arg2 : i32, i32, i32
  }
  func.func @transform_3(%arg0: i32, %arg1: i32, %arg2: i32, %arg3: i32) -> (i32, i32, i32) {
    %c0_i32 = arith.constant 0 : i32
    return %arg0, %arg3, %arg2 : i32, i32, i32
  }
  func.func @transform_4(%arg0: i32, %arg1: i32, %arg2: i32, %arg3: i32) -> (i32, i32, i32) {
    %c0_i32 = arith.constant 0 : i32
    %c0_i32_0 = arith.constant 0 : i32
    return %arg0, %arg3, %c0_i32 : i32, i32, i32
  }
  func.func @transform_5(%arg0: i32, %arg1: i32, %arg2: i32, %arg3: i32) -> (i32, i32, i32) {
    %c0_i32 = arith.constant 0 : i32
    %c0_i32_0 = arith.constant 0 : i32
    return %arg0, %arg3, %c0_i32 : i32, i32, i32
  }
  func.func @transform_6(%arg0: i32, %arg1: i32, %arg2: i32, %arg3: i32) -> (i32, i32, i32, i32, i32) {
    %c0_i32 = arith.constant 0 : i32
    %c0_i32_0 = arith.constant 0 : i32
    %c0_i32_1 = arith.constant 0 : i32
    return %arg0, %arg1, %arg2, %c0_i32, %c0_i32_0 : i32, i32, i32, i32, i32
  }
}

</mosaic_0001>

<llo_original>
// kernel: hybrid_mimicking_losses.2
$region0: #{hybrid_mimicking_losses.2}
  #allocation0 [shape = 'u32[]', space=smem, size = 0x4, offset = 0x4, fixed_abs, tag = 'smem constant byte address 0x4 - core index']
  #allocation1 [shape = 'u32[144,128]{1,0:T(1,128)}', space=vmem, size = 0x12000, scoped, tag = 'internal scratch']
  #allocation2 [shape = 'f32[1,32]{1,0:T(1,128)}', space=vmem, size = 0x200, scoped, tag = 'scratch operand']
  #allocation3 [shape = 'f32[1,32]{1,0:T(1,128)}', space=vmem, size = 0x200, scoped, tag = 'scratch operand']
  %s0 = inlined_call_operand.vmem [shape: bf16[8,8,32], index: 0, kind: input, shape index: {}]
  %s1 = inlined_call_operand.vmem [shape: bf16[8,8,32], index: 1, kind: input, shape index: {}]
  %s2 = inlined_call_operand.vmem [shape: bf16[32,2], index: 2, kind: input, shape index: {}]
  %s3 = inlined_call_operand.vmem [shape: f32[8,1,1], index: 3, kind: input, shape index: {}]
  %s4 = inlined_call_operand.vmem [shape: f32[8,1,8], index: 4, kind: output, shape index: {0}]
  %s5 = inlined_call_operand.vmem [shape: f32[8,1,32], index: 5, kind: output, shape index: {1}]
  %s6 = inlined_call_operand.vmem [shape: f32[8,8,1], index: 6, kind: output, shape index: {2}]
  %s7 = inlined_call_operand.vmem [shape: f32[8,8,1], index: 7, kind: output, shape index: {3}]
  %8 = xla_tuple %s4, %s5, %s6, %s7
  %s9 = sld [smem:[#allocation0]]
  $region77: #{hybrid_mimicking_losses.2} parent=0
    _
  %s11 = ssub.s32 1, %s9
  %s12 = scalar_select 0, %s11, %s9
  loop: start=0, step=1, limit=10
  $region2: #{hybrid_mimicking_losses.2} parent=0 // loop_pre_header
    _
  $region3: #{hybrid_mimicking_losses.2} parent=0 // loop_header
    %s14 = sphi 0, %s18
    %p15 = scmp.ge.s32.totalorder %s14, 10
    %s21 = sphi 0, %s33
    %s22 = sphi 0, %s29
    %s23 = sphi 0, %s21
    %s24 = sphi 0, %s22
    %s25 = sphi 0, %s23
    %s26 = sphi 0, %s24
    %s38 = sphi 0, %s40
    %s41 = sphi 0, %s38
    %s42 = sphi 0, %s41
    %s58 = sphi 0, %s42
    %s66 = sphi 0, %s68
    %s69 = sphi 0, %s66
    %s70 = sphi 0, %s69
    %s86 = sphi 0, %s70
    %s90 = sphi 0, %s90
    %s92 = sphi 0, %s90
    %s93 = sphi 0, %s92
    %s107 = sphi 0, %s93
    %s113 = sphi 0, %s115
    %s116 = sphi 0, %s113
    %s117 = sphi 0, %s116
    %s133 = sphi 0, %s117
    %s139 = sphi 0, %s141
    %s142 = sphi 0, %s139
    %s143 = sphi 0, %s142
    %s159 = sphi 0, %s143
    %s165 = sphi 0, %s167
    %s168 = sphi 0, %s165
    %s169 = sphi 0, %s168
    %s185 = sphi 0, %s169
    %s193 = sphi 0, %s195
    %s196 = sphi 0, %s193
    %s197 = sphi 0, %s196
    %s213 = sphi 0, %s197
    %s221 = sphi 0, %s223
    %s224 = sphi 0, %s221
    %s225 = sphi 0, %s224
    %s241 = sphi 0, %s225
  $region4: #{hybrid_mimicking_losses.2} parent=0 // loop_header_branch
    %17 = sbr.rel (%p15) target = $region8
  $region5: #{hybrid_mimicking_losses.2} parent=0 // loop_body
    %s19 = ssub.s32 %s14, 1
    %s20 = ssub.s32 %s14, 2
    %s27 = sadd.s32 1, %s22
    %p28 = scmp.ge.s32.totalorder %s27, 1
    %s29 = scalar_select %p28, 0, %s27
    %s30 = sadd.s32 1, %s21
    %s31 = scalar_select %p28, %s30, %s21
    %p32 = scmp.ge.s32.totalorder %s31, 8
    %s33 = scalar_select %p32, 0, %s31
    %s34 = ssub.s32 %s21, %s33
    %s35 = ssub.s32 %s22, %s29
    %s36 = sor.u32 %s34, %s35
    %p37 = scmp.eq.s32.totalorder %s36, 0
    %s39 = sadd.s32 %s38, 1
    %s40 = scalar_select %p37, %s38, %s39
    %p43 = pneg %p37
    %p44 = scmp.eq.s32.totalorder %s14, 7
    %p45 = por %p43, %p44
    %p46 = scmp.ne.s32.totalorder %s38, %s41
    %p47 = scmp.eq.s32.totalorder %s14, 0
    %p48 = por %p46, %p47
    %p49 = scmp.ne.s32.totalorder %s38, %s41
    %p50 = scmp.eq.s32.totalorder %s19, 7
    %p51 = por %p49, %p50
    %p52 = scmp.ne.s32.totalorder %s41, %s42
    %p53 = scmp.eq.s32.totalorder %s19, 0
    %p54 = por %p52, %p53
    %p55 = scmp.ne.s32.totalorder %s41, %s42
    %p56 = scmp.eq.s32.totalorder %s20, 7
    %p57 = por %p55, %p56
    %p59 = scmp.ne.s32.totalorder %s42, %s58
    %p60 = scmp.eq.s32.totalorder %s20, 0
    %p61 = por %p59, %p60
    %s62 = ssub.s32 %s21, %s33
    %s63 = ssub.s32 %s22, %s29
    %s64 = sor.u32 %s62, %s63
    %p65 = scmp.eq.s32.totalorder %s64, 0
    %s67 = sadd.s32 %s66, 1
    %s68 = scalar_select %p65, %s66, %s67
    %p71 = pneg %p65
    %p72 = scmp.eq.s32.totalorder %s14, 7
    %p73 = por %p71, %p72
    %p74 = scmp.ne.s32.totalorder %s66, %s69
    %p75 = scmp.eq.s32.totalorder %s14, 0
    %p76 = por %p74, %p75
    %p77 = scmp.ne.s32.totalorder %s66, %s69
    %p78 = scmp.eq.s32.totalorder %s19, 7
    %p79 = por %p77, %p78
    %p80 = scmp.ne.s32.totalorder %s69, %s70
    %p81 = scmp.eq.s32.totalorder %s19, 0
    %p82 = por %p80, %p81
    %p83 = scmp.ne.s32.totalorder %s69, %s70
    %p84 = scmp.eq.s32.totalorder %s20, 7
    %p85 = por %p83, %p84
    %p87 = scmp.ne.s32.totalorder %s70, %s86
    %p88 = scmp.eq.s32.totalorder %s20, 0
    %p89 = por %p87, %p88
    %s91 = sadd.s32 %s90, 1
    %p94 = scmp.eq.s32.totalorder %s14, 7
    %p95 = scmp.ne.s32.totalorder %s90, %s92
    %p96 = scmp.eq.s32.totalorder %s14, 0
    %p97 = por %p95, %p96
    %p98 = scmp.ne.s32.totalorder %s90, %s92
    %p99 = scmp.eq.s32.totalorder %s19, 7
    %p100 = por %p98, %p99
    %p101 = scmp.ne.s32.totalorder %s92, %s93
    %p102 = scmp.eq.s32.totalorder %s19, 0
    %p103 = por %p101, %p102
    %p104 = scmp.ne.s32.totalorder %s92, %s93
    %p105 = scmp.eq.s32.totalorder %s20, 7
    %p106 = por %p104, %p105
    %p108 = scmp.ne.s32.totalorder %s93, %s107
    %p109 = scmp.eq.s32.totalorder %s20, 0
    %p110 = por %p108, %p109
    %s111 = ssub.s32 %s21, %s33
    %p112 = scmp.eq.s32.totalorder %s111, 0
    %s114 = sadd.s32 %s113, 1
    %s115 = scalar_select %p112, %s113, %s114
    %p118 = pneg %p112
    %p119 = scmp.eq.s32.totalorder %s14, 7
    %p120 = por %p118, %p119
    %p121 = scmp.ne.s32.totalorder %s113, %s116
    %p122 = scmp.eq.s32.totalorder %s14, 0
    %p123 = por %p121, %p122
    %p124 = scmp.ne.s32.totalorder %s113, %s116
    %p125 = scmp.eq.s32.totalorder %s19, 7
    %p126 = por %p124, %p125
    %p127 = scmp.ne.s32.totalorder %s116, %s117
    %p128 = scmp.eq.s32.totalorder %s19, 0
    %p129 = por %p127, %p128
    %p130 = scmp.ne.s32.totalorder %s116, %s117
    %p131 = scmp.eq.s32.totalorder %s20, 7
    %p132 = por %p130, %p131
    %p134 = scmp.ne.s32.totalorder %s117, %s133
    %p135 = scmp.eq.s32.totalorder %s20, 0
    %p136 = por %p134, %p135
    %s137 = ssub.s32 %s21, %s33
    %p138 = scmp.eq.s32.totalorder %s137, 0
    %s140 = sadd.s32 %s139, 1
    %s141 = scalar_select %p138, %s139, %s140
    %p144 = pneg %p138
    %p145 = scmp.eq.s32.totalorder %s14, 7
    %p146 = por %p144, %p145
    %p147 = scmp.ne.s32.totalorder %s139, %s142
    %p148 = scmp.eq.s32.totalorder %s14, 0
    %p149 = por %p147, %p148
    %p150 = scmp.ne.s32.totalorder %s139, %s142
    %p151 = scmp.eq.s32.totalorder %s19, 7
    %p152 = por %p150, %p151
    %p153 = scmp.ne.s32.totalorder %s142, %s143
    %p154 = scmp.eq.s32.totalorder %s19, 0
    %p155 = por %p153, %p154
    %p156 = scmp.ne.s32.totalorder %s142, %s143
    %p157 = scmp.eq.s32.totalorder %s20, 7
    %p158 = por %p156, %p157
    %p160 = scmp.ne.s32.totalorder %s143, %s159
    %p161 = scmp.eq.s32.totalorder %s20, 0
    %p162 = por %p160, %p161
    %s163 = ssub.s32 %s21, %s33
    %p164 = scmp.eq.s32.totalorder %s163, 0
    %s166 = sadd.s32 %s165, 1
    %s167 = scalar_select %p164, %s165, %s166
    %p170 = pneg %p164
    %p171 = scmp.eq.s32.totalorder %s14, 7
    %p172 = por %p170, %p171
    %p173 = scmp.ne.s32.totalorder %s165, %s168
    %p174 = scmp.eq.s32.totalorder %s14, 0
    %p175 = por %p173, %p174
    %p176 = scmp.ne.s32.totalorder %s165, %s168
    %p177 = scmp.eq.s32.totalorder %s19, 7
    %p178 = por %p176, %p177
    %p179 = scmp.ne.s32.totalorder %s168, %s169
    %p180 = scmp.eq.s32.totalorder %s19, 0
    %p181 = por %p179, %p180
    %p182 = scmp.ne.s32.totalorder %s168, %s169
    %p183 = scmp.eq.s32.totalorder %s20, 7
    %p184 = por %p182, %p183
    %p186 = scmp.ne.s32.totalorder %s169, %s185
    %p187 = scmp.eq.s32.totalorder %s20, 0
    %p188 = por %p186, %p187
    %s189 = ssub.s32 %s21, %s33
    %s190 = ssub.s32 %s22, %s29
    %s191 = sor.u32 %s189, %s190
    %p192 = scmp.eq.s32.totalorder %s191, 0
    %s194 = sadd.s32 %s193, 1
    %s195 = scalar_select %p192, %s193, %s194
    %p198 = pneg %p192
    %p199 = scmp.eq.s32.totalorder %s14, 7
    %p200 = por %p198, %p199
    %p201 = scmp.ne.s32.totalorder %s193, %s196
    %p202 = scmp.eq.s32.totalorder %s14, 0
    %p203 = por %p201, %p202
    %p204 = scmp.ne.s32.totalorder %s193, %s196
    %p205 = scmp.eq.s32.totalorder %s19, 7
    %p206 = por %p204, %p205
    %p207 = scmp.ne.s32.totalorder %s196, %s197
    %p208 = scmp.eq.s32.totalorder %s19, 0
    %p209 = por %p207, %p208
    %p210 = scmp.ne.s32.totalorder %s196, %s197
    %p211 = scmp.eq.s32.totalorder %s20, 7
    %p212 = por %p210, %p211
    %p214 = scmp.ne.s32.totalorder %s197, %s213
    %p215 = scmp.eq.s32.totalorder %s20, 0
    %p216 = por %p214, %p215
    %s217 = ssub.s32 %s21, %s33
    %s218 = ssub.s32 %s22, %s29
    %s219 = sor.u32 %s217, %s218
    %p220 = scmp.eq.s32.totalorder %s219, 0
    %s222 = sadd.s32 %s221, 1
    %s223 = scalar_select %p220, %s221, %s222
    %p226 = pneg %p220
    %p227 = scmp.eq.s32.totalorder %s14, 7
    %p228 = por %p226, %p227
    %p229 = scmp.ne.s32.totalorder %s221, %s224
    %p230 = scmp.eq.s32.totalorder %s14, 0
    %p231 = por %p229, %p230
    %p232 = scmp.ne.s32.totalorder %s221, %s224
    %p233 = scmp.eq.s32.totalorder %s19, 7
    %p234 = por %p232, %p233
    %p235 = scmp.ne.s32.totalorder %s224, %s225
    %p236 = scmp.eq.s32.totalorder %s19, 0
    %p237 = por %p235, %p236
    %p238 = scmp.ne.s32.totalorder %s224, %s225
    %p239 = scmp.eq.s32.totalorder %s20, 7
    %p240 = por %p238, %p239
    %p242 = scmp.ne.s32.totalorder %s225, %s241
    %p243 = scmp.eq.s32.totalorder %s20, 0
    %p244 = por %p242, %p243
    %p245 = scmp.le.s32.totalorder 1, %s14
    %p246 = scmp.lt.s32.totalorder %s14, 9
    %p247 = pnand %p245, %p246
    %p248 = pneg %p247
    // Predicated region
    $region9: #{hybrid_mimicking_losses.2} parent=5 // pred_check
      _
    $region10: #{hybrid_mimicking_losses.2} parent=5 // pred_check_branch
      %250 = sbr.rel (%p247) target = $region12
    $region11: #{hybrid_mimicking_losses.2} parent=5 // pred_region
      %s251 = ssub.s32 %s14, 1
      // Predicated region
      $region13: #{hybrid_mimicking_losses.2} parent=11 // pred_check
        %p252 = pneg %p103
      $region14: #{hybrid_mimicking_losses.2} parent=11 // pred_check_branch
        %254 = sbr.rel (%p252) target = $region16
      $region15: #{hybrid_mimicking_losses.2} parent=11 // pred_region
        _
      $region16: #{hybrid_mimicking_losses.2} parent=11 // pred_fallthru
        _
    $region12: #{hybrid_mimicking_losses.2} parent=5 // pred_fallthru
      _
    %p255 = scmp.lt.s32.totalorder %s14, 8
    // Predicated region
    $region17: #{hybrid_mimicking_losses.2} parent=5 // pred_check
      %p256 = pneg %p255
    $region18: #{hybrid_mimicking_losses.2} parent=5 // pred_check_branch
      %258 = sbr.rel (%p256) target = $region20
    $region19: #{hybrid_mimicking_losses.2} parent=5 // pred_region
      // Predicated region
      $region21: #{hybrid_mimicking_losses.2} parent=19 // pred_check
        %p259 = pneg %p48
      $region22: #{hybrid_mimicking_losses.2} parent=19 // pred_check_branch
        %261 = sbr.rel (%p259) target = $region24
      $region23: #{hybrid_mimicking_losses.2} parent=19 // pred_region
        %p262 = scmp.lt.s32.totalorder %s21, 7
        %s263 = scalar_select %p262, %s21, 7
        %p264 = scmp.lt.s32.totalorder %s22, 0
        %s265 = scalar_select %p264, %s22, 0
        %s266 = sadd.s32 %s265, %s263
        %s267 = smul.addr %s266, 4
        %s268 = scalar_lea.vmem %s0, %s267
      $region24: #{hybrid_mimicking_losses.2} parent=19 // pred_fallthru
        _
      // Predicated region
      $region25: #{hybrid_mimicking_losses.2} parent=19 // pred_check
        %p269 = pneg %p76
      $region26: #{hybrid_mimicking_losses.2} parent=19 // pred_check_branch
        %271 = sbr.rel (%p269) target = $region28
      $region27: #{hybrid_mimicking_losses.2} parent=19 // pred_region
        %p272 = scmp.lt.s32.totalorder %s21, 7
        %s273 = scalar_select %p272, %s21, 7
        %p274 = scmp.lt.s32.totalorder %s22, 0
        %s275 = scalar_select %p274, %s22, 0
        %s276 = sadd.s32 %s275, %s273
        %s277 = smul.addr %s276, 4
        %s278 = scalar_lea.vmem %s1, %s277
      $region28: #{hybrid_mimicking_losses.2} parent=19 // pred_fallthru
        _
      // Predicated region
      $region29: #{hybrid_mimicking_losses.2} parent=19 // pred_check
        %p279 = pneg %p123
      $region30: #{hybrid_mimicking_losses.2} parent=19 // pred_check_branch
        %281 = sbr.rel (%p279) target = $region32
      $region31: #{hybrid_mimicking_losses.2} parent=19 // pred_region
        %p282 = scmp.lt.s32.totalorder %s21, 7
        %s283 = scalar_select %p282, %s21, 7
        %s284 = scalar_lea.vmem %s3, %s283
      $region32: #{hybrid_mimicking_losses.2} parent=19 // pred_fallthru
        _
    $region20: #{hybrid_mimicking_losses.2} parent=5 // pred_fallthru
      _
    %p285 = scmp.le.s32.totalorder 1, %s14
    %p286 = scmp.lt.s32.totalorder %s14, 9
    %p287 = pnand %p285, %p286
    %p288 = pneg %p287
    // Predicated region
    $region33: #{hybrid_mimicking_losses.2} parent=5 // pred_check
      _
    $region34: #{hybrid_mimicking_losses.2} parent=5 // pred_check_branch
      %290 = sbr.rel (%p287) target = $region36
    $region35: #{hybrid_mimicking_losses.2} parent=5 // pred_region
      %s291 = ssub.s32 %s14, 1
      %p292 = scmp.lt.s32.totalorder %s23, 7
      %s293 = scalar_select %p292, %s23, 7
      %p294 = scmp.lt.s32.totalorder %s24, 0
      %s295 = scalar_select %p294, %s24, 0
      %s296 = sadd.s32 %s295, %s293
      %s297 = smul.addr %s296, 4
      %s298 = scalar_lea.vmem %s0, %s297
      %p299 = pneg %p54
      %p300 = pneg %p51
      %p301 = scmp.lt.s32.totalorder %s23, 7
      %s302 = scalar_select %p301, %s23, 7
      %p303 = scmp.lt.s32.totalorder %s24, 0
      %s304 = scalar_select %p303, %s24, 0
      %s305 = sadd.s32 %s304, %s302
      %s306 = smul.addr %s305, 4
      %s307 = scalar_lea.vmem %s1, %s306
      %p308 = pneg %p82
      %p309 = pneg %p79
      %p310 = pneg %p103
      %p311 = pneg %p100
      %p312 = scmp.lt.s32.totalorder %s23, 7
      %s313 = scalar_select %p312, %s23, 7
      %s314 = scalar_lea.vmem %s3, %s313
      %p315 = pneg %p129
      %p316 = pneg %p126
      %p317 = pneg %p155
      %p318 = pneg %p152
      %p319 = scmp.lt.s32.totalorder %s23, 7
      %s320 = scalar_select %p319, %s23, 7
      %s321 = scalar_lea.vmem %s4, %s320
      %p322 = pneg %p181
      %p323 = pneg %p178
      %p324 = scmp.lt.s32.totalorder %s23, 7
      %s325 = scalar_select %p324, %s23, 7
      %s326 = scalar_lea.vmem %s5, %s325
      %p327 = pneg %p209
      %p328 = pneg %p206
      %p329 = scmp.lt.s32.totalorder %s23, 7
      %s330 = scalar_select %p329, %s23, 7
      %p331 = scmp.lt.s32.totalorder %s24, 0
      %s332 = scalar_select %p331, %s24, 0
      %s333 = sadd.s32 %s332, %s330
      %s334 = smul.addr %s333, 8
      %s335 = scalar_lea.vmem %s6, %s334
      %p336 = pneg %p237
      %p337 = pneg %p234
      %p338 = scmp.lt.s32.totalorder %s23, 7
      %s339 = scalar_select %p338, %s23, 7
      %p340 = scmp.lt.s32.totalorder %s24, 0
      %s341 = scalar_select %p340, %s24, 0
      %s342 = sadd.s32 %s341, %s339
      %s343 = smul.addr %s342, 8
      %s344 = scalar_lea.vmem %s7, %s343
      %p345 = scmp.lt.s32.totalorder %s23, 7
      %s346 = scalar_select %p345, %s23, 7
      %p347 = scmp.lt.s32.totalorder %s24, 0
      %s348 = scalar_select %p347, %s24, 0
      %s349 = sadd.s32 %s348, %s346
      %s350 = smul.addr %s349, 4
      %s351 = scalar_lea.vmem %s0, %s350
      %p352 = scmp.lt.s32.totalorder %s23, 7
      %s353 = scalar_select %p352, %s23, 7
      %p354 = scmp.lt.s32.totalorder %s24, 0
      %s355 = scalar_select %p354, %s24, 0
      %s356 = sadd.s32 %s355, %s353
      %s357 = smul.addr %s356, 4
      %s358 = scalar_lea.vmem %s1, %s357
      %p359 = scmp.lt.s32.totalorder %s23, 7
      %s360 = scalar_select %p359, %s23, 7
      %s361 = scalar_lea.vmem %s3, %s360
      %p362 = scmp.lt.s32.totalorder %s23, 7
      %s363 = scalar_select %p362, %s23, 7
      %s364 = scalar_lea.vmem %s4, %s363
      %p365 = scmp.lt.s32.totalorder %s23, 7
      %s366 = scalar_select %p365, %s23, 7
      %s367 = scalar_lea.vmem %s5, %s366
      %p368 = scmp.lt.s32.totalorder %s23, 7
      %s369 = scalar_select %p368, %s23, 7
      %p370 = scmp.lt.s32.totalorder %s24, 0
      %s371 = scalar_select %p370, %s24, 0
      %s372 = sadd.s32 %s371, %s369
      %s373 = smul.addr %s372, 8
      %s374 = scalar_lea.vmem %s6, %s373
      %p375 = scmp.lt.s32.totalorder %s23, 7
      %s376 = scalar_select %p375, %s23, 7
      %p377 = scmp.lt.s32.totalorder %s24, 0
      %s378 = scalar_select %p377, %s24, 0
      %s379 = sadd.s32 %s378, %s376
      %s380 = smul.addr %s379, 8
      %s381 = scalar_lea.vmem %s7, %s380
      %p383 = scmp.eq.s32.totalorder %s24, 0
      // Predicated region
      $region37: #{hybrid_mimicking_losses.2} parent=35 // pred_check
        %p384 = pneg %p383
      $region38: #{hybrid_mimicking_losses.2} parent=35 // pred_check_branch
        %386 = sbr.rel (%p384) target = $region40
      $region39: #{hybrid_mimicking_losses.2} parent=35 // pred_region
        %vm387 = vcmask 57344
        %388 = vst.msk [vmem:[%s364] sm:$0x1] %vm387, 0.0
        %vm389 = vcmask 253952
        %390 = vst.msk [vmem:[%s367] sm:$0x1] %vm389, 0.0
        %391 = vst.msk [vmem:[#allocation2] sm:$0x1] %vm389, 0.0
        %392 = vst.msk [vmem:[#allocation3] sm:$0x1] %vm389, 0.0
      $region40: #{hybrid_mimicking_losses.2} parent=35 // pred_fallthru
        _
      %v393 = vld [vmem:[%s351] sm:$0xf]
      %v394 = vld [vmem:[%s358] sm:$0xf]
      %v395 = vunpack.c.l.bf16 %v393
      %v396 = vunpack.c.l.bf16 %v394
      %v397 = vmul.f32 %v395, %v395
      %vm398 = vcmask 261120
      %v399 = vsel %vm398, %v397, 0.0
      %400 = vadd.xlane.f32.xlu0 %v399
      %v401 = vpop.xlane.xlu0 %400
      %v402 = vmul.f32 %v395, %v396
      %v403 = vsel %vm398, %v402, 0.0
      %404 = vadd.xlane.f32.xlu0 %v403
      %v405 = vpop.xlane.xlu0 %404
      %v406 = vmul.f32 %v396, %v396
      %v407 = vsel %vm398, %v406, 0.0
      %408 = vadd.xlane.f32.xlu0 %v407
      %v409 = vpop.xlane.xlu0 %408
      %v410 = vrsqrt.pop %v401
      %v411 = vmul.f32 %v401, %v410
      %vm412 = vcmp.eq.f32.partialorder %v401, inf
      %v413 = vsel %vm412, %v401, %v411
      %vm414 = vcmp.eq.f32.partialorder %v401, 0.0
      %v415 = vand.u32 %v401, 2147483648
      %v416 = vsel %vm414, %v415, %v413
      %v417 = vmax.f32 %v416, 1e-12
      %v418 = vrcp.pop %v417
      %v419 = vmul.f32 1.0, %v418
      %vm420 = vcmask 7168
      %421 = vst.msk [vmem:[%s374] sm:$0xff] %vm420, %v419
      %v422 = vrsqrt.pop %v409
      %v423 = vmul.f32 %v409, %v422
      %vm424 = vcmp.eq.f32.partialorder %v409, inf
      %v425 = vsel %vm424, %v409, %v423
      %vm426 = vcmp.eq.f32.partialorder %v409, 0.0
      %v427 = vand.u32 %v409, 2147483648
      %v428 = vsel %vm426, %v427, %v425
      %v429 = vmax.f32 %v428, 1e-12
      %v430 = vrcp.pop %v429
      %v431 = vmul.f32 1.0, %v430
      %432 = vst.msk [vmem:[%s381] sm:$0xff] %vm420, %v431
      %v433 = vlaneseq
      %v434 = vshrl.u32 %v433, 7
      %s435 = smul.u32 %s24, 8
      %v436 = vstv %s435
      %v437 = vadd.s32 %v436, %v434
      %vm438 = vcmp.lt.s32.totalorder %v437, 8
      %v439 = vsel %vm438, 1, 0
      %v440 = vcvt.s32.f32 %v439
      %v441 = vmul.f32 %v401, %v409
      %v442 = vmax.f32 %v441, 1e-16
      %v443 = vrsqrt.pop %v442
      %v444 = vmul.f32 %v405, %v443
      %v445 = vsub.f32 1.0, %v444
      %v446 = vmul.f32 %v440, %v445
      %v447 = vsel %vm420, %v446, 0.0
      %448 = vadd.xlane.f32.xlu0 %v447
      %v449 = vpop.xlane.xlu0 %448
      %v450 = vrot.slane %v449, 4
      %v451 = vadd.f32 %v449, %v450
      %v452 = vrot.slane %v451, 2
      %v453 = vadd.f32 %v451, %v452
      %v454 = vrot.slane %v453, 1
      %v455 = vadd.f32 %v453, %v454
      %s456 = vtos %v455
      %v457 = vld [vmem:[%s361] sm:$0x1]
      %v459 = vlaneseq
      %v460 = vshrl.u32 %v459, 7
      %v461 = vsub.s32 0, %v460
      %v462 = vrot.slane %v457, %v461
      %463 = vset.pattern.permute.xlu0 0
      %464 = vperm.xlu0 %463, %v462
      %v465 = vpop.permute.xlu0 %464
      %v467 = vmul.f32 %v465, %v396
      %v468 = vsub.f32 %v395, %v467
      %v469 = vmul.f32 %v468, %v468
      %v470 = vsel %vm398, %v469, 0.0
      %471 = vadd.xlane.f32.xlu0 %v470
      %v472 = vpop.xlane.xlu0 %471
      %v473 = vrsqrt.pop %v472
      %v474 = vmul.f32 %v472, %v473
      %vm475 = vcmp.eq.f32.partialorder %v472, inf
      %v476 = vsel %vm475, %v472, %v474
      %vm477 = vcmp.eq.f32.partialorder %v472, 0.0
      %v478 = vand.u32 %v472, 2147483648
      %v479 = vsel %vm477, %v478, %v476
      %v480 = vsel %vm420, %v479, 0.0
      %481 = vadd.xlane.f32.xlu0 %v480
      %v482 = vpop.xlane.xlu0 %481
      %v483 = vrot.slane %v482, 4
      %v484 = vadd.f32 %v482, %v483
      %v485 = vrot.slane %v484, 2
      %v486 = vadd.f32 %v484, %v485
      %v487 = vrot.slane %v486, 1
      %v488 = vadd.f32 %v486, %v487
      %s489 = vtos %v488
      %v490 = vsub.f32 %v395, %v396
      %v491 = vld [vmem:[%s367] sm:$0x1]
      %v492 = vsel %vm398, %v490, 0.0
      %v493 = vrot.slane %v492, 4
      %v494 = vadd.f32 %v492, %v493
      %v495 = vrot.slane %v494, 2
      %v496 = vadd.f32 %v494, %v495
      %v497 = vrot.slane %v496, 1
      %v498 = vadd.f32 %v496, %v497
      %v499 = vadd.f32 %v491, %v498
      %vm500 = vcmask 253952
      %501 = vst.msk [vmem:[%s367] sm:$0x1] %vm500, %v499
      %v502 = vpack.c.bf16 %v490, %v490
      %v503 = vld [vmem:[%s2] sm:$0xf]
      %v504 = vld [vmem:[%s2 + $0x4] sm:$0xf]
      %v505 = vld [vmem:[%s2 + $0x8] sm:$0xf]
      %v506 = vld [vmem:[%s2 + $0xc] sm:$0xf]
      %v511 = vunpack.c.l.b16 %v503
      %v512 = vunpack.c.l.b16 %v504
      %v513 = vunpack.c.l.b16 %v505
      %v514 = vunpack.c.l.b16 %v506
      %v515 = vpack.c.b16 %v512, %v511
      %v516 = vpack.c.b16 %v514, %v513
      %v520 = vsel %vm398, %v502, 0
      %522 = vmatprep.subr.bf16.mxu0 0
      %523 = vmatpush1.bf16.msra.mxu0 %v515
      %524 = vmatprep.subr.bf16.mxu0 0
      %525 = vmatpush1.bf16.msra.mxu0 %v516
      %526 = vmatprep.subr.bf16.mxu0 0
      %527 = vmatpush1.bf16.msra.mxu0 0
      %528 = vmatprep.subr.bf16.mxu0 0
      %529 = vmatpush1.bf16.msra.mxu0 0
      %530 = vmatprep.subr.bf16.mxu0 0
      %531 = vmatpush1.bf16.msra.mxu0 0
      %532 = vmatprep.subr.bf16.mxu0 0
      %533 = vmatpush1.bf16.msra.mxu0 0
      %534 = vmatprep.subr.bf16.mxu0 0
      %535 = vmatpush1.bf16.msra.mxu0 0
      %536 = vmatprep.subr.bf16.mxu0 0
      %537 = vmatpush1.bf16.msra.mxu0 0
      %538 = vmatprep.subr.bf16.mxu0 0
      %539 = vmatpush1.bf16.msra.mxu0 0
      %540 = vmatprep.subr.bf16.mxu0 0
      %541 = vmatpush1.bf16.msra.mxu0 0
      %542 = vmatprep.subr.bf16.mxu0 0
      %543 = vmatpush1.bf16.msra.mxu0 0
      %544 = vmatprep.subr.bf16.mxu0 0
      %545 = vmatpush1.bf16.msra.mxu0 0
      %546 = vmatprep.subr.bf16.mxu0 0
      %547 = vmatpush1.bf16.msra.mxu0 0
      %548 = vmatprep.subr.bf16.mxu0 0
      %549 = vmatpush1.bf16.msra.mxu0 0
      %550 = vmatprep.subr.bf16.mxu0 0
      %551 = vmatpush1.bf16.msra.mxu0 0
      %552 = vmatprep.subr.bf16.mxu0 0
      %553 = vmatpush1.bf16.msra.mxu0 0
      %554 = vmatprep.mubr.bf16.mxu0 0
      %555 = vmatmul.mubr.bf16.gmra.mrb[0].mxu0 %v520
      %v556 = vpop.f32.mrb[0].mxu0
      %v557 = vadd.f32 0.0, %v556
      %v558 = vpop.f32.mrb[0].mxu0
      %v559 = vpop.f32.mrb[0].mxu0
      %v560 = vpop.f32.mrb[0].mxu0
      %561 = vdwg.mxu0
      %v562 = vmul.f32 %v557, %v557
      %vm563 = vcmask 15360
      %v564 = vsel %vm563, %v562, 0.0
      %565 = vadd.xlane.f32.xlu0 %v564
      %v566 = vpop.xlane.xlu0 %565
      %v567 = vrot.slane %v566, 4
      %v568 = vadd.f32 %v566, %v567
      %v569 = vrot.slane %v568, 2
      %v570 = vadd.f32 %v568, %v569
      %v571 = vrot.slane %v570, 1
      %v572 = vadd.f32 %v570, %v571
      %s573 = vtos %v572
      %vm574 = vcmp.lt.s32.totalorder %v434, 7
      %v575 = vadd.s32 %v437, 1
      %vm576 = vcmp.lt.s32.totalorder %v575, 8
      %vm577 = vmand %vm574, %vm576
      %v578 = vsel %vm577, 1, 0
      %v579 = vcvt.s32.f32 %v578
      %v580 = vrot.slane %v395, 1
      %v581 = vsub.f32 %v580, %v395
      %v582 = vmul.f32 %v579, %v581
      %v583 = vrot.slane %v396, 1
      %v584 = vsub.f32 %v583, %v396
      %v585 = vmul.f32 %v579, %v584
      %v586 = vmul.f32 %v582, %v585
      %v587 = vsel %vm398, %v586, 0.0
      %588 = vadd.xlane.f32.xlu0 %v587
      %v589 = vpop.xlane.xlu0 %588
      %v590 = vrot.slane %v589, 4
      %v591 = vadd.f32 %v589, %v590
      %v592 = vrot.slane %v591, 2
      %v593 = vadd.f32 %v591, %v592
      %v594 = vrot.slane %v593, 1
      %v595 = vadd.f32 %v593, %v594
      %s596 = vtos %v595
      %v597 = vmul.f32 %v582, %v582
      %v598 = vsel %vm398, %v597, 0.0
      %599 = vadd.xlane.f32.xlu0 %v598
      %v600 = vpop.xlane.xlu0 %599
      %v601 = vrot.slane %v600, 4
      %v602 = vadd.f32 %v600, %v601
      %v603 = vrot.slane %v602, 2
      %v604 = vadd.f32 %v602, %v603
      %v605 = vrot.slane %v604, 1
      %v606 = vadd.f32 %v604, %v605
      %s607 = vtos %v606
      %v608 = vmul.f32 %v585, %v585
      %v609 = vsel %vm398, %v608, 0.0
      %610 = vadd.xlane.f32.xlu0 %v609
      %v611 = vpop.xlane.xlu0 %610
      %v612 = vrot.slane %v611, 4
      %v613 = vadd.f32 %v611, %v612
      %v614 = vrot.slane %v613, 2
      %v615 = vadd.f32 %v613, %v614
      %v616 = vrot.slane %v615, 1
      %v617 = vadd.f32 %v615, %v616
      %s618 = vtos %v617
      %v619 = vld [vmem:[#allocation2] sm:$0x1]
      %v620 = vsub.f32 %v395, %v619
      %v621 = vld [vmem:[#allocation3] sm:$0x1]
      %v622 = vsub.f32 %v396, %v621
      %p623 = scmp.gt.s32.totalorder %s24, 0
      %s624 = scalar_select %p623, 1, 0
      %s625 = scvt.s32.f32 %s624
      %v626 = vmul.f32 %v620, %v622
      %v627 = vsel %vm500, %v626, 0.0
      %628 = vadd.xlane.f32.xlu0 %v627
      %v629 = vpop.xlane.xlu0 %628
      %v630 = vrot.slane %v629, 4
      %v631 = vadd.f32 %v629, %v630
      %v632 = vrot.slane %v631, 2
      %v633 = vadd.f32 %v631, %v632
      %v634 = vrot.slane %v633, 1
      %v635 = vadd.f32 %v633, %v634
      %s636 = vtos %v635
      %s637 = smul.f32 %s625, %s636
      %s638 = sadd.f32 %s596, %s637
      %v639 = vmul.f32 %v620, %v620
      %v640 = vsel %vm500, %v639, 0.0
      %641 = vadd.xlane.f32.xlu0 %v640
      %v642 = vpop.xlane.xlu0 %641
      %v643 = vrot.slane %v642, 4
      %v644 = vadd.f32 %v642, %v643
      %v645 = vrot.slane %v644, 2
      %v646 = vadd.f32 %v644, %v645
      %v647 = vrot.slane %v646, 1
      %v648 = vadd.f32 %v646, %v647
      %s649 = vtos %v648
      %s650 = smul.f32 %s625, %s649
      %s651 = sadd.f32 %s607, %s650
      %v652 = vmul.f32 %v622, %v622
      %v653 = vsel %vm500, %v652, 0.0
      %654 = vadd.xlane.f32.xlu0 %v653
      %v655 = vpop.xlane.xlu0 %654
      %v656 = vrot.slane %v655, 4
      %v657 = vadd.f32 %v655, %v656
      %v658 = vrot.slane %v657, 2
      %v659 = vadd.f32 %v657, %v658
      %v660 = vrot.slane %v659, 1
      %v661 = vadd.f32 %v659, %v660
      %s662 = vtos %v661
      %s663 = smul.f32 %s625, %s662
      %s664 = sadd.f32 %s618, %s663
      %vm665 = vcmask 261127
      %666 = vst.msk [vmem:[#allocation2 - $0x7] sm:$0x80] %vm665, %v395
      %667 = vst.msk [vmem:[#allocation3 - $0x7] sm:$0x80] %vm665, %v396
      %v668 = vlaneseq
      %v669 = vand.u32 %v668, 127
      %v670 = vld [vmem:[%s364] sm:$0x1]
      %vm671 = vcmp.eq.s32.totalorder %v669, 0
      %v672 = vstv %s489
      %v673 = vsel %vm671, %v672, 0.0
      %vm674 = vcmp.eq.s32.totalorder %v669, 1
      %v675 = vstv %s456
      %v676 = vsel %vm674, %v675, 0.0
      %v677 = vadd.f32 %v673, %v676
      %vm678 = vcmp.eq.s32.totalorder %v669, 2
      %v679 = vstv %s573
      %v680 = vsel %vm678, %v679, 0.0
      %v681 = vadd.f32 %v677, %v680
      %vm682 = vcmp.eq.s32.totalorder %v669, 3
      %v683 = vstv %s638
      %v684 = vsel %vm682, %v683, 0.0
      %v685 = vadd.f32 %v681, %v684
      %vm686 = vcmp.eq.s32.totalorder %v669, 4
      %v687 = vstv %s651
      %v688 = vsel %vm686, %v687, 0.0
      %v689 = vadd.f32 %v685, %v688
      %vm690 = vcmp.eq.s32.totalorder %v669, 5
      %v691 = vstv %s664
      %v692 = vsel %vm690, %v691, 0.0
      %v693 = vadd.f32 %v689, %v692
      %v694 = vadd.f32 %v670, %v693
      %vm695 = vcmask 57344
      %696 = vst.msk [vmem:[%s364] sm:$0x1] %vm695, %v694
      %p697 = scmp.lt.s32.totalorder %s23, 7
      %s698 = scalar_select %p697, %s23, 7
      %s699 = scalar_lea.vmem %s4, %s698
      %p700 = scmp.lt.s32.totalorder %s23, 7
      %s701 = scalar_select %p700, %s23, 7
      %s702 = scalar_lea.vmem %s5, %s701
      %p703 = scmp.lt.s32.totalorder %s23, 7
      %s704 = scalar_select %p703, %s23, 7
      %p705 = scmp.lt.s32.totalorder %s24, 0
      %s706 = scalar_select %p705, %s24, 0
      %s707 = sadd.s32 %s706, %s704
      %s708 = smul.addr %s707, 8
      %s709 = scalar_lea.vmem %s6, %s708
      %p710 = scmp.lt.s32.totalorder %s23, 7
      %s711 = scalar_select %p710, %s23, 7
      %p712 = scmp.lt.s32.totalorder %s24, 0
      %s713 = scalar_select %p712, %s24, 0
      %s714 = sadd.s32 %s713, %s711
      %s715 = smul.addr %s714, 8
      %s716 = scalar_lea.vmem %s7, %s715
      // Predicated region
      $region41: #{hybrid_mimicking_losses.2} parent=35 // pred_check
        %p717 = pneg %p152
      $region42: #{hybrid_mimicking_losses.2} parent=35 // pred_check_branch
        %719 = sbr.rel (%p717) target = $region44
      $region43: #{hybrid_mimicking_losses.2} parent=35 // pred_region
        _
      $region44: #{hybrid_mimicking_losses.2} parent=35 // pred_fallthru
        _
      // Predicated region
      $region45: #{hybrid_mimicking_losses.2} parent=35 // pred_check
        %p720 = pneg %p178
      $region46: #{hybrid_mimicking_losses.2} parent=35 // pred_check_branch
        %722 = sbr.rel (%p720) target = $region48
      $region47: #{hybrid_mimicking_losses.2} parent=35 // pred_region
        _
      $region48: #{hybrid_mimicking_losses.2} parent=35 // pred_fallthru
        _
      // Predicated region
      $region49: #{hybrid_mimicking_losses.2} parent=35 // pred_check
        %p723 = pneg %p206
      $region50: #{hybrid_mimicking_losses.2} parent=35 // pred_check_branch
        %725 = sbr.rel (%p723) target = $region52
      $region51: #{hybrid_mimicking_losses.2} parent=35 // pred_region
        _
      $region52: #{hybrid_mimicking_losses.2} parent=35 // pred_fallthru
        _
      // Predicated region
      $region53: #{hybrid_mimicking_losses.2} parent=35 // pred_check
        %p726 = pneg %p234
      $region54: #{hybrid_mimicking_losses.2} parent=35 // pred_check_branch
        %728 = sbr.rel (%p726) target = $region56
      $region55: #{hybrid_mimicking_losses.2} parent=35 // pred_region
        _
      $region56: #{hybrid_mimicking_losses.2} parent=35 // pred_fallthru
        _
    $region36: #{hybrid_mimicking_losses.2} parent=5 // pred_fallthru
      _
    %p729 = scmp.le.s32.totalorder 2, %s14
    // Predicated region
    $region57: #{hybrid_mimicking_losses.2} parent=5 // pred_check
      %p730 = pneg %p729
    $region58: #{hybrid_mimicking_losses.2} parent=5 // pred_check_branch
      %732 = sbr.rel (%p730) target = $region60
    $region59: #{hybrid_mimicking_losses.2} parent=5 // pred_region
      %s733 = ssub.s32 %s14, 2
      // Predicated region
      $region61: #{hybrid_mimicking_losses.2} parent=59 // pred_check
        %p734 = pneg %p158
      $region62: #{hybrid_mimicking_losses.2} parent=59 // pred_check_branch
        %736 = sbr.rel (%p734) target = $region64
      $region63: #{hybrid_mimicking_losses.2} parent=59 // pred_region
        %p737 = scmp.lt.s32.totalorder %s25, 7
        %s738 = scalar_select %p737, %s25, 7
        %s739 = scalar_lea.vmem %s4, %s738
      $region64: #{hybrid_mimicking_losses.2} parent=59 // pred_fallthru
        _
      // Predicated region
      $region65: #{hybrid_mimicking_losses.2} parent=59 // pred_check
        %p740 = pneg %p184
      $region66: #{hybrid_mimicking_losses.2} parent=59 // pred_check_branch
        %742 = sbr.rel (%p740) target = $region68
      $region67: #{hybrid_mimicking_losses.2} parent=59 // pred_region
        %p743 = scmp.lt.s32.totalorder %s25, 7
        %s744 = scalar_select %p743, %s25, 7
        %s745 = scalar_lea.vmem %s5, %s744
      $region68: #{hybrid_mimicking_losses.2} parent=59 // pred_fallthru
        _
      // Predicated region
      $region69: #{hybrid_mimicking_losses.2} parent=59 // pred_check
        %p746 = pneg %p212
      $region70: #{hybrid_mimicking_losses.2} parent=59 // pred_check_branch
        %748 = sbr.rel (%p746) target = $region72
      $region71: #{hybrid_mimicking_losses.2} parent=59 // pred_region
        %p749 = scmp.lt.s32.totalorder %s25, 7
        %s750 = scalar_select %p749, %s25, 7
        %p751 = scmp.lt.s32.totalorder %s26, 0
        %s752 = scalar_select %p751, %s26, 0
        %s753 = sadd.s32 %s752, %s750
        %s754 = smul.addr %s753, 8
        %s755 = scalar_lea.vmem %s6, %s754
      $region72: #{hybrid_mimicking_losses.2} parent=59 // pred_fallthru
        _
      // Predicated region
      $region73: #{hybrid_mimicking_losses.2} parent=59 // pred_check
        %p756 = pneg %p240
      $region74: #{hybrid_mimicking_losses.2} parent=59 // pred_check_branch
        %758 = sbr.rel (%p756) target = $region76
      $region75: #{hybrid_mimicking_losses.2} parent=59 // pred_region
        %p759 = scmp.lt.s32.totalorder %s25, 7
        %s760 = scalar_select %p759, %s25, 7
        %p761 = scmp.lt.s32.totalorder %s26, 0
        %s762 = scalar_select %p761, %s26, 0
        %s763 = sadd.s32 %s762, %s760
        %s764 = smul.addr %s763, 8
        %s765 = scalar_lea.vmem %s7, %s764
      $region76: #{hybrid_mimicking_losses.2} parent=59 // pred_fallthru
        _
    $region60: #{hybrid_mimicking_losses.2} parent=5 // pred_fallthru
      _
  $region6: #{hybrid_mimicking_losses.2} parent=0 // loop_footer
    %s18 = sadd.s32 1, %s14
  $region7: #{hybrid_mimicking_losses.2} parent=0 // loop_footer_branch
    %13 = sbr.rel target = $region3
  $region8: #{hybrid_mimicking_losses.2} parent=0 // loop_exit
    _

// kernel: hybrid_mimicking_losses.3
$region0: #{hybrid_mimicking_losses.3}
  #allocation0 [shape = 'u32[]', space=smem, size = 0x4, offset = 0x4, fixed_abs, tag = 'smem constant byte address 0x4 - core index']
  #allocation1 [shape = 'u32[144,128]{1,0:T(1,128)}', space=vmem, size = 0x12000, scoped, tag = 'internal scratch']
  #allocation2 [shape = 'f32[32,32]{1,0:T(8,128)}', space=vmem, size = 0x4000, scoped, tag = 'scratch operand']
  #allocation3 [shape = 'f32[32,32]{1,0:T(8,128)}', space=vmem, size = 0x4000, scoped, tag = 'scratch operand']
  #allocation4 [shape = 'f32[32,32]{1,0:T(8,128)}', space=vmem, size = 0x4000, scoped, tag = 'scratch operand']
  #allocation5 [shape = 'f32[32,32]{1,0:T(8,128)}', space=vmem, size = 0x4000, scoped, tag = 'scratch operand']
  #allocation6 [shape = 'f32[32,32]{1,0:T(8,128)}', space=vmem, size = 0x4000, scoped, tag = 'scratch operand']
  %s0 = inlined_call_operand.vmem [shape: bf16[8,8,32], index: 0, kind: input, shape index: {}, may-alias: {0,2}]
  %s1 = inlined_call_operand.vmem [shape: bf16[8,8,32], index: 1, kind: input, shape index: {}, may-alias: {1,3}]
  %s2 = inlined_call_operand.vmem [shape: bf16[8,8,32], index: 2, kind: input, shape index: {}, may-alias: {0,2}]
  %s3 = inlined_call_operand.vmem [shape: bf16[8,8,32], index: 3, kind: input, shape index: {}, may-alias: {1,3}]
  %s4 = inlined_call_operand.vmem [shape: f32[8,8,1], index: 4, kind: input, shape index: {}]
  %s5 = inlined_call_operand.vmem [shape: f32[8,8,1], index: 5, kind: input, shape index: {}]
  %s6 = inlined_call_operand.vmem [shape: f32[8,1,1,1,8], index: 6, kind: output, shape index: {}]
  %s7 = sld [smem:[#allocation0]]
  $region65: #{hybrid_mimicking_losses.3} parent=0
    _
  %s9 = ssub.s32 1, %s7
  %s10 = scalar_select 0, %s9, %s7
  loop: start=0, step=1, limit=10
  $region2: #{hybrid_mimicking_losses.3} parent=0 // loop_pre_header
    _
  $region3: #{hybrid_mimicking_losses.3} parent=0 // loop_header
    %s12 = sphi 0, %s16
    %p13 = scmp.ge.s32.totalorder %s12, 10
    %s19 = sphi 0, %s45
    %s20 = sphi 0, %s41
    %s21 = sphi 0, %s37
    %s22 = sphi 0, %s33
    %s23 = sphi 0, %s19
    %s24 = sphi 0, %s20
    %s25 = sphi 0, %s21
    %s26 = sphi 0, %s22
    %s27 = sphi 0, %s23
    %s28 = sphi 0, %s24
    %s29 = sphi 0, %s25
    %s30 = sphi 0, %s26
    %s52 = sphi 0, %s54
    %s55 = sphi 0, %s52
    %s56 = sphi 0, %s55
    %s72 = sphi 0, %s56
    %s82 = sphi 0, %s84
    %s85 = sphi 0, %s82
    %s86 = sphi 0, %s85
    %s102 = sphi 0, %s86
    %s112 = sphi 0, %s114
    %s115 = sphi 0, %s112
    %s116 = sphi 0, %s115
    %s132 = sphi 0, %s116
    %s142 = sphi 0, %s144
    %s145 = sphi 0, %s142
    %s146 = sphi 0, %s145
    %s162 = sphi 0, %s146
    %s170 = sphi 0, %s172
    %s173 = sphi 0, %s170
    %s174 = sphi 0, %s173
    %s190 = sphi 0, %s174
    %s198 = sphi 0, %s200
    %s201 = sphi 0, %s198
    %s202 = sphi 0, %s201
    %s218 = sphi 0, %s202
    %s228 = sphi 0, %s230
    %s231 = sphi 0, %s228
    %s232 = sphi 0, %s231
    %s248 = sphi 0, %s232
  $region4: #{hybrid_mimicking_losses.3} parent=0 // loop_header_branch
    %15 = sbr.rel (%p13) target = $region8
  $region5: #{hybrid_mimicking_losses.3} parent=0 // loop_body
    %s17 = ssub.s32 %s12, 1
    %s18 = ssub.s32 %s12, 2
    %s31 = sadd.s32 1, %s22
    %p32 = scmp.ge.s32.totalorder %s31, 1
    %s33 = scalar_select %p32, 0, %s31
    %s34 = sadd.s32 1, %s21
    %s35 = scalar_select %p32, %s34, %s21
    %p36 = scmp.ge.s32.totalorder %s35, 1
    %s37 = scalar_select %p36, 0, %s35
    %s38 = sadd.s32 1, %s20
    %s39 = scalar_select %p36, %s38, %s20
    %p40 = scmp.ge.s32.totalorder %s39, 1
    %s41 = scalar_select %p40, 0, %s39
    %s42 = sadd.s32 1, %s19
    %s43 = scalar_select %p40, %s42, %s19
    %p44 = scmp.ge.s32.totalorder %s43, 8
    %s45 = scalar_select %p44, 0, %s43
    %s46 = ssub.s32 %s19, %s45
    %s47 = ssub.s32 %s22, %s33
    %s48 = sor.u32 %s46, %s47
    %s49 = ssub.s32 %s20, %s41
    %s50 = sor.u32 %s48, %s49
    %p51 = scmp.eq.s32.totalorder %s50, 0
    %s53 = sadd.s32 %s52, 1
    %s54 = scalar_select %p51, %s52, %s53
    %p57 = pneg %p51
    %p58 = scmp.eq.s32.totalorder %s12, 7
    %p59 = por %p57, %p58
    %p60 = scmp.ne.s32.totalorder %s52, %s55
    %p61 = scmp.eq.s32.totalorder %s12, 0
    %p62 = por %p60, %p61
    %p63 = scmp.ne.s32.totalorder %s52, %s55
    %p64 = scmp.eq.s32.totalorder %s17, 7
    %p65 = por %p63, %p64
    %p66 = scmp.ne.s32.totalorder %s55, %s56
    %p67 = scmp.eq.s32.totalorder %s17, 0
    %p68 = por %p66, %p67
    %p69 = scmp.ne.s32.totalorder %s55, %s56
    %p70 = scmp.eq.s32.totalorder %s18, 7
    %p71 = por %p69, %p70
    %p73 = scmp.ne.s32.totalorder %s56, %s72
    %p74 = scmp.eq.s32.totalorder %s18, 0
    %p75 = por %p73, %p74
    %s76 = ssub.s32 %s19, %s45
    %s77 = ssub.s32 %s22, %s33
    %s78 = sor.u32 %s76, %s77
    %s79 = ssub.s32 %s20, %s41
    %s80 = sor.u32 %s78, %s79
    %p81 = scmp.eq.s32.totalorder %s80, 0
    %s83 = sadd.s32 %s82, 1
    %s84 = scalar_select %p81, %s82, %s83
    %p87 = pneg %p81
    %p88 = scmp.eq.s32.totalorder %s12, 7
    %p89 = por %p87, %p88
    %p90 = scmp.ne.s32.totalorder %s82, %s85
    %p91 = scmp.eq.s32.totalorder %s12, 0
    %p92 = por %p90, %p91
    %p93 = scmp.ne.s32.totalorder %s82, %s85
    %p94 = scmp.eq.s32.totalorder %s17, 7
    %p95 = por %p93, %p94
    %p96 = scmp.ne.s32.totalorder %s85, %s86
    %p97 = scmp.eq.s32.totalorder %s17, 0
    %p98 = por %p96, %p97
    %p99 = scmp.ne.s32.totalorder %s85, %s86
    %p100 = scmp.eq.s32.totalorder %s18, 7
    %p101 = por %p99, %p100
    %p103 = scmp.ne.s32.totalorder %s86, %s102
    %p104 = scmp.eq.s32.totalorder %s18, 0
    %p105 = por %p103, %p104
    %s106 = ssub.s32 %s19, %s45
    %s107 = ssub.s32 %s22, %s33
    %s108 = sor.u32 %s106, %s107
    %s109 = ssub.s32 %s21, %s37
    %s110 = sor.u32 %s108, %s109
    %p111 = scmp.eq.s32.totalorder %s110, 0
    %s113 = sadd.s32 %s112, 1
    %s114 = scalar_select %p111, %s112, %s113
    %p117 = pneg %p111
    %p118 = scmp.eq.s32.totalorder %s12, 7
    %p119 = por %p117, %p118
    %p120 = scmp.ne.s32.totalorder %s112, %s115
    %p121 = scmp.eq.s32.totalorder %s12, 0
    %p122 = por %p120, %p121
    %p123 = scmp.ne.s32.totalorder %s112, %s115
    %p124 = scmp.eq.s32.totalorder %s17, 7
    %p125 = por %p123, %p124
    %p126 = scmp.ne.s32.totalorder %s115, %s116
    %p127 = scmp.eq.s32.totalorder %s17, 0
    %p128 = por %p126, %p127
    %p129 = scmp.ne.s32.totalorder %s115, %s116
    %p130 = scmp.eq.s32.totalorder %s18, 7
    %p131 = por %p129, %p130
    %p133 = scmp.ne.s32.totalorder %s116, %s132
    %p134 = scmp.eq.s32.totalorder %s18, 0
    %p135 = por %p133, %p134
    %s136 = ssub.s32 %s19, %s45
    %s137 = ssub.s32 %s22, %s33
    %s138 = sor.u32 %s136, %s137
    %s139 = ssub.s32 %s21, %s37
    %s140 = sor.u32 %s138, %s139
    %p141 = scmp.eq.s32.totalorder %s140, 0
    %s143 = sadd.s32 %s142, 1
    %s144 = scalar_select %p141, %s142, %s143
    %p147 = pneg %p141
    %p148 = scmp.eq.s32.totalorder %s12, 7
    %p149 = por %p147, %p148
    %p150 = scmp.ne.s32.totalorder %s142, %s145
    %p151 = scmp.eq.s32.totalorder %s12, 0
    %p152 = por %p150, %p151
    %p153 = scmp.ne.s32.totalorder %s142, %s145
    %p154 = scmp.eq.s32.totalorder %s17, 7
    %p155 = por %p153, %p154
    %p156 = scmp.ne.s32.totalorder %s145, %s146
    %p157 = scmp.eq.s32.totalorder %s17, 0
    %p158 = por %p156, %p157
    %p159 = scmp.ne.s32.totalorder %s145, %s146
    %p160 = scmp.eq.s32.totalorder %s18, 7
    %p161 = por %p159, %p160
    %p163 = scmp.ne.s32.totalorder %s146, %s162
    %p164 = scmp.eq.s32.totalorder %s18, 0
    %p165 = por %p163, %p164
    %s166 = ssub.s32 %s19, %s45
    %s167 = ssub.s32 %s22, %s33
    %s168 = sor.u32 %s166, %s167
    %p169 = scmp.eq.s32.totalorder %s168, 0
    %s171 = sadd.s32 %s170, 1
    %s172 = scalar_select %p169, %s170, %s171
    %p175 = pneg %p169
    %p176 = scmp.eq.s32.totalorder %s12, 7
    %p177 = por %p175, %p176
    %p178 = scmp.ne.s32.totalorder %s170, %s173
    %p179 = scmp.eq.s32.totalorder %s12, 0
    %p180 = por %p178, %p179
    %p181 = scmp.ne.s32.totalorder %s170, %s173
    %p182 = scmp.eq.s32.totalorder %s17, 7
    %p183 = por %p181, %p182
    %p184 = scmp.ne.s32.totalorder %s173, %s174
    %p185 = scmp.eq.s32.totalorder %s17, 0
    %p186 = por %p184, %p185
    %p187 = scmp.ne.s32.totalorder %s173, %s174
    %p188 = scmp.eq.s32.totalorder %s18, 7
    %p189 = por %p187, %p188
    %p191 = scmp.ne.s32.totalorder %s174, %s190
    %p192 = scmp.eq.s32.totalorder %s18, 0
    %p193 = por %p191, %p192
    %s194 = ssub.s32 %s19, %s45
    %s195 = ssub.s32 %s22, %s33
    %s196 = sor.u32 %s194, %s195
    %p197 = scmp.eq.s32.totalorder %s196, 0
    %s199 = sadd.s32 %s198, 1
    %s200 = scalar_select %p197, %s198, %s199
    %p203 = pneg %p197
    %p204 = scmp.eq.s32.totalorder %s12, 7
    %p205 = por %p203, %p204
    %p206 = scmp.ne.s32.totalorder %s198, %s201
    %p207 = scmp.eq.s32.totalorder %s12, 0
    %p208 = por %p206, %p207
    %p209 = scmp.ne.s32.totalorder %s198, %s201
    %p210 = scmp.eq.s32.totalorder %s17, 7
    %p211 = por %p209, %p210
    %p212 = scmp.ne.s32.totalorder %s201, %s202
    %p213 = scmp.eq.s32.totalorder %s17, 0
    %p214 = por %p212, %p213
    %p215 = scmp.ne.s32.totalorder %s201, %s202
    %p216 = scmp.eq.s32.totalorder %s18, 7
    %p217 = por %p215, %p216
    %p219 = scmp.ne.s32.totalorder %s202, %s218
    %p220 = scmp.eq.s32.totalorder %s18, 0
    %p221 = por %p219, %p220
    %s222 = ssub.s32 %s19, %s45
    %s223 = ssub.s32 %s20, %s41
    %s224 = sor.u32 %s222, %s223
    %s225 = ssub.s32 %s21, %s37
    %s226 = sor.u32 %s224, %s225
    %p227 = scmp.eq.s32.totalorder %s226, 0
    %s229 = sadd.s32 %s228, 1
    %s230 = scalar_select %p227, %s228, %s229
    %p233 = pneg %p227
    %p234 = scmp.eq.s32.totalorder %s12, 7
    %p235 = por %p233, %p234
    %p236 = scmp.ne.s32.totalorder %s228, %s231
    %p237 = scmp.eq.s32.totalorder %s12, 0
    %p238 = por %p236, %p237
    %p239 = scmp.ne.s32.totalorder %s228, %s231
    %p240 = scmp.eq.s32.totalorder %s17, 7
    %p241 = por %p239, %p240
    %p242 = scmp.ne.s32.totalorder %s231, %s232
    %p243 = scmp.eq.s32.totalorder %s17, 0
    %p244 = por %p242, %p243
    %p245 = scmp.ne.s32.totalorder %s231, %s232
    %p246 = scmp.eq.s32.totalorder %s18, 7
    %p247 = por %p245, %p246
    %p249 = scmp.ne.s32.totalorder %s232, %s248
    %p250 = scmp.eq.s32.totalorder %s18, 0
    %p251 = por %p249, %p250
    %p252 = scmp.le.s32.totalorder 1, %s12
    %p253 = scmp.lt.s32.totalorder %s12, 9
    %p254 = pnand %p252, %p253
    %p255 = pneg %p254
    // Predicated region
    $region9: #{hybrid_mimicking_losses.3} parent=5 // pred_check
      _
    $region10: #{hybrid_mimicking_losses.3} parent=5 // pred_check_branch
      %257 = sbr.rel (%p254) target = $region12
    $region11: #{hybrid_mimicking_losses.3} parent=5 // pred_region
      %s258 = ssub.s32 %s12, 1
    $region12: #{hybrid_mimicking_losses.3} parent=5 // pred_fallthru
      _
    %p259 = scmp.lt.s32.totalorder %s12, 8
    // Predicated region
    $region13: #{hybrid_mimicking_losses.3} parent=5 // pred_check
      %p260 = pneg %p259
    $region14: #{hybrid_mimicking_losses.3} parent=5 // pred_check_branch
      %262 = sbr.rel (%p260) target = $region16
    $region15: #{hybrid_mimicking_losses.3} parent=5 // pred_region
      // Predicated region
      $region17: #{hybrid_mimicking_losses.3} parent=15 // pred_check
        %p263 = pneg %p62
      $region18: #{hybrid_mimicking_losses.3} parent=15 // pred_check_branch
        %265 = sbr.rel (%p263) target = $region20
      $region19: #{hybrid_mimicking_losses.3} parent=15 // pred_region
        %p266 = scmp.lt.s32.totalorder %s19, 7
        %s267 = scalar_select %p266, %s19, 7
        %p268 = scmp.lt.s32.totalorder %s22, 0
        %s269 = scalar_select %p268, %s22, 0
        %p270 = scmp.lt.s32.totalorder %s20, 0
        %s271 = scalar_select %p270, %s20, 0
        %s272 = sadd.s32 %s271, %s269
        %s273 = sadd.s32 %s272, %s267
        %s274 = smul.addr %s273, 4
        %s275 = scalar_lea.vmem %s0, %s274
      $region20: #{hybrid_mimicking_losses.3} parent=15 // pred_fallthru
        _
      // Predicated region
      $region21: #{hybrid_mimicking_losses.3} parent=15 // pred_check
        %p276 = pneg %p92
      $region22: #{hybrid_mimicking_losses.3} parent=15 // pred_check_branch
        %278 = sbr.rel (%p276) target = $region24
      $region23: #{hybrid_mimicking_losses.3} parent=15 // pred_region
        %p279 = scmp.lt.s32.totalorder %s19, 7
        %s280 = scalar_select %p279, %s19, 7
        %p281 = scmp.lt.s32.totalorder %s22, 0
        %s282 = scalar_select %p281, %s22, 0
        %p283 = scmp.lt.s32.totalorder %s20, 0
        %s284 = scalar_select %p283, %s20, 0
        %s285 = sadd.s32 %s284, %s282
        %s286 = sadd.s32 %s285, %s280
        %s287 = smul.addr %s286, 4
        %s288 = scalar_lea.vmem %s1, %s287
      $region24: #{hybrid_mimicking_losses.3} parent=15 // pred_fallthru
        _
      // Predicated region
      $region25: #{hybrid_mimicking_losses.3} parent=15 // pred_check
        %p289 = pneg %p122
      $region26: #{hybrid_mimicking_losses.3} parent=15 // pred_check_branch
        %291 = sbr.rel (%p289) target = $region28
      $region27: #{hybrid_mimicking_losses.3} parent=15 // pred_region
        %p292 = scmp.lt.s32.totalorder %s19, 7
        %s293 = scalar_select %p292, %s19, 7
        %p294 = scmp.lt.s32.totalorder %s22, 0
        %s295 = scalar_select %p294, %s22, 0
        %p296 = scmp.lt.s32.totalorder %s21, 0
        %s297 = scalar_select %p296, %s21, 0
        %s298 = sadd.s32 %s297, %s295
        %s299 = sadd.s32 %s298, %s293
        %s300 = smul.addr %s299, 4
        %s301 = scalar_lea.vmem %s2, %s300
      $region28: #{hybrid_mimicking_losses.3} parent=15 // pred_fallthru
        _
      // Predicated region
      $region29: #{hybrid_mimicking_losses.3} parent=15 // pred_check
        %p302 = pneg %p152
      $region30: #{hybrid_mimicking_losses.3} parent=15 // pred_check_branch
        %304 = sbr.rel (%p302) target = $region32
      $region31: #{hybrid_mimicking_losses.3} parent=15 // pred_region
        %p305 = scmp.lt.s32.totalorder %s19, 7
        %s306 = scalar_select %p305, %s19, 7
        %p307 = scmp.lt.s32.totalorder %s22, 0
        %s308 = scalar_select %p307, %s22, 0
        %p309 = scmp.lt.s32.totalorder %s21, 0
        %s310 = scalar_select %p309, %s21, 0
        %s311 = sadd.s32 %s310, %s308
        %s312 = sadd.s32 %s311, %s306
        %s313 = smul.addr %s312, 4
        %s314 = scalar_lea.vmem %s3, %s313
      $region32: #{hybrid_mimicking_losses.3} parent=15 // pred_fallthru
        _
      // Predicated region
      $region33: #{hybrid_mimicking_losses.3} parent=15 // pred_check
        %p315 = pneg %p180
      $region34: #{hybrid_mimicking_losses.3} parent=15 // pred_check_branch
        %317 = sbr.rel (%p315) target = $region36
      $region35: #{hybrid_mimicking_losses.3} parent=15 // pred_region
        %p318 = scmp.lt.s32.totalorder %s19, 7
        %s319 = scalar_select %p318, %s19, 7
        %p320 = scmp.lt.s32.totalorder %s22, 0
        %s321 = scalar_select %p320, %s22, 0
        %s322 = sadd.s32 %s321, %s319
        %s323 = smul.addr %s322, 8
        %s324 = scalar_lea.vmem %s4, %s323
      $region36: #{hybrid_mimicking_losses.3} parent=15 // pred_fallthru
        _
      // Predicated region
      $region37: #{hybrid_mimicking_losses.3} parent=15 // pred_check
        %p325 = pneg %p208
      $region38: #{hybrid_mimicking_losses.3} parent=15 // pred_check_branch
        %327 = sbr.rel (%p325) target = $region40
      $region39: #{hybrid_mimicking_losses.3} parent=15 // pred_region
        %p328 = scmp.lt.s32.totalorder %s19, 7
        %s329 = scalar_select %p328, %s19, 7
        %p330 = scmp.lt.s32.totalorder %s22, 0
        %s331 = scalar_select %p330, %s22, 0
        %s332 = sadd.s32 %s331, %s329
        %s333 = smul.addr %s332, 8
        %s334 = scalar_lea.vmem %s5, %s333
      $region40: #{hybrid_mimicking_losses.3} parent=15 // pred_fallthru
        _
    $region16: #{hybrid_mimicking_losses.3} parent=5 // pred_fallthru
      _
    %p335 = scmp.le.s32.totalorder 1, %s12
    %p336 = scmp.lt.s32.totalorder %s12, 9
    %p337 = pnand %p335, %p336
    %p338 = pneg %p337
    // Predicated region
    $region41: #{hybrid_mimicking_losses.3} parent=5 // pred_check
      _
    $region42: #{hybrid_mimicking_losses.3} parent=5 // pred_check_branch
      %340 = sbr.rel (%p337) target = $region44
    $region43: #{hybrid_mimicking_losses.3} parent=5 // pred_region
      %s341 = ssub.s32 %s12, 1
      %p342 = scmp.lt.s32.totalorder %s23, 7
      %s343 = scalar_select %p342, %s23, 7
      %p344 = scmp.lt.s32.totalorder %s26, 0
      %s345 = scalar_select %p344, %s26, 0
      %p346 = scmp.lt.s32.totalorder %s24, 0
      %s347 = scalar_select %p346, %s24, 0
      %s348 = sadd.s32 %s347, %s345
      %s349 = sadd.s32 %s348, %s343
      %s350 = smul.addr %s349, 4
      %s351 = scalar_lea.vmem %s0, %s350
      %p352 = pneg %p68
      %p353 = pneg %p65
      %p354 = scmp.lt.s32.totalorder %s23, 7
      %s355 = scalar_select %p354, %s23, 7
      %p356 = scmp.lt.s32.totalorder %s26, 0
      %s357 = scalar_select %p356, %s26, 0
      %p358 = scmp.lt.s32.totalorder %s24, 0
      %s359 = scalar_select %p358, %s24, 0
      %s360 = sadd.s32 %s359, %s357
      %s361 = sadd.s32 %s360, %s355
      %s362 = smul.addr %s361, 4
      %s363 = scalar_lea.vmem %s1, %s362
      %p364 = pneg %p98
      %p365 = pneg %p95
      %p366 = scmp.lt.s32.totalorder %s23, 7
      %s367 = scalar_select %p366, %s23, 7
      %p368 = scmp.lt.s32.totalorder %s26, 0
      %s369 = scalar_select %p368, %s26, 0
      %p370 = scmp.lt.s32.totalorder %s25, 0
      %s371 = scalar_select %p370, %s25, 0
      %s372 = sadd.s32 %s371, %s369
      %s373 = sadd.s32 %s372, %s367
      %s374 = smul.addr %s373, 4
      %s375 = scalar_lea.vmem %s2, %s374
      %p376 = pneg %p128
      %p377 = pneg %p125
      %p378 = scmp.lt.s32.totalorder %s23, 7
      %s379 = scalar_select %p378, %s23, 7
      %p380 = scmp.lt.s32.totalorder %s26, 0
      %s381 = scalar_select %p380, %s26, 0
      %p382 = scmp.lt.s32.totalorder %s25, 0
      %s383 = scalar_select %p382, %s25, 0
      %s384 = sadd.s32 %s383, %s381
      %s385 = sadd.s32 %s384, %s379
      %s386 = smul.addr %s385, 4
      %s387 = scalar_lea.vmem %s3, %s386
      %p388 = pneg %p158
      %p389 = pneg %p155
      %p390 = scmp.lt.s32.totalorder %s23, 7
      %s391 = scalar_select %p390, %s23, 7
      %p392 = scmp.lt.s32.totalorder %s26, 0
      %s393 = scalar_select %p392, %s26, 0
      %s394 = sadd.s32 %s393, %s391
      %s395 = smul.addr %s394, 8
      %s396 = scalar_lea.vmem %s4, %s395
      %p397 = pneg %p186
      %p398 = pneg %p183
      %p399 = scmp.lt.s32.totalorder %s23, 7
      %s400 = scalar_select %p399, %s23, 7
      %p401 = scmp.lt.s32.totalorder %s26, 0
      %s402 = scalar_select %p401, %s26, 0
      %s403 = sadd.s32 %s402, %s400
      %s404 = smul.addr %s403, 8
      %s405 = scalar_lea.vmem %s5, %s404
      %p406 = pneg %p214
      %p407 = pneg %p211
      %p408 = pneg %p244
      %p409 = pneg %p241
      %p410 = scmp.lt.s32.totalorder %s23, 7
      %s411 = scalar_select %p410, %s23, 7
      %p412 = scmp.lt.s32.totalorder %s24, 0
      %s413 = scalar_select %p412, %s24, 0
      %p414 = scmp.lt.s32.totalorder %s25, 0
      %s415 = scalar_select %p414, %s25, 0
      %s416 = sadd.s32 %s415, %s413
      %s417 = sadd.s32 %s416, %s411
      %s418 = scalar_lea.vmem %s6, %s417
      %p419 = scmp.lt.s32.totalorder %s23, 7
      %s420 = scalar_select %p419, %s23, 7
      %p421 = scmp.lt.s32.totalorder %s26, 0
      %s422 = scalar_select %p421, %s26, 0
      %p423 = scmp.lt.s32.totalorder %s24, 0
      %s424 = scalar_select %p423, %s24, 0
      %s425 = sadd.s32 %s424, %s422
      %s426 = sadd.s32 %s425, %s420
      %s427 = smul.addr %s426, 4
      %s428 = scalar_lea.vmem %s0, %s427
      %p429 = scmp.lt.s32.totalorder %s23, 7
      %s430 = scalar_select %p429, %s23, 7
      %p431 = scmp.lt.s32.totalorder %s26, 0
      %s432 = scalar_select %p431, %s26, 0
      %p433 = scmp.lt.s32.totalorder %s24, 0
      %s434 = scalar_select %p433, %s24, 0
      %s435 = sadd.s32 %s434, %s432
      %s436 = sadd.s32 %s435, %s430
      %s437 = smul.addr %s436, 4
      %s438 = scalar_lea.vmem %s1, %s437
      %p439 = scmp.lt.s32.totalorder %s23, 7
      %s440 = scalar_select %p439, %s23, 7
      %p441 = scmp.lt.s32.totalorder %s26, 0
      %s442 = scalar_select %p441, %s26, 0
      %p443 = scmp.lt.s32.totalorder %s25, 0
      %s444 = scalar_select %p443, %s25, 0
      %s445 = sadd.s32 %s444, %s442
      %s446 = sadd.s32 %s445, %s440
      %s447 = smul.addr %s446, 4
      %s448 = scalar_lea.vmem %s2, %s447
      %p449 = scmp.lt.s32.totalorder %s23, 7
      %s450 = scalar_select %p449, %s23, 7
      %p451 = scmp.lt.s32.totalorder %s26, 0
      %s452 = scalar_select %p451, %s26, 0
      %p453 = scmp.lt.s32.totalorder %s25, 0
      %s454 = scalar_select %p453, %s25, 0
      %s455 = sadd.s32 %s454, %s452
      %s456 = sadd.s32 %s455, %s450
      %s457 = smul.addr %s456, 4
      %s458 = scalar_lea.vmem %s3, %s457
      %p459 = scmp.lt.s32.totalorder %s23, 7
      %s460 = scalar_select %p459, %s23, 7
      %p461 = scmp.lt.s32.totalorder %s26, 0
      %s462 = scalar_select %p461, %s26, 0
      %s463 = sadd.s32 %s462, %s460
      %s464 = smul.addr %s463, 8
      %s465 = scalar_lea.vmem %s4, %s464
      %p466 = scmp.lt.s32.totalorder %s23, 7
      %s467 = scalar_select %p466, %s23, 7
      %p468 = scmp.lt.s32.totalorder %s26, 0
      %s469 = scalar_select %p468, %s26, 0
      %s470 = sadd.s32 %s469, %s467
      %s471 = smul.addr %s470, 8
      %s472 = scalar_lea.vmem %s5, %s471
      %p473 = scmp.lt.s32.totalorder %s23, 7
      %s474 = scalar_select %p473, %s23, 7
      %p475 = scmp.lt.s32.totalorder %s24, 0
      %s476 = scalar_select %p475, %s24, 0
      %p477 = scmp.lt.s32.totalorder %s25, 0
      %s478 = scalar_select %p477, %s25, 0
      %s479 = sadd.s32 %s478, %s476
      %s480 = sadd.s32 %s479, %s474
      %s481 = scalar_lea.vmem %s6, %s480
      %p483 = scmp.eq.s32.totalorder %s26, 0
      // Predicated region
      $region45: #{hybrid_mimicking_losses.3} parent=43 // pred_check
        %p484 = pneg %p483
      $region46: #{hybrid_mimicking_losses.3} parent=43 // pred_check_branch
        %486 = sbr.rel (%p484) target = $region48
      $region47: #{hybrid_mimicking_losses.3} parent=43 // pred_region
        %vm487 = vcmask 261120
        %488 = vst.msk [vmem:[#allocation2] sm:$0xff] %vm487, 0.0
        %489 = vst.msk [vmem:[#allocation2 + $0x8] sm:$0xff] %vm487, 0.0
        %490 = vst.msk [vmem:[#allocation2 + $0x10] sm:$0xff] %vm487, 0.0
        %491 = vst.msk [vmem:[#allocation2 + $0x18] sm:$0xff] %vm487, 0.0
        %492 = vst.msk [vmem:[#allocation3] sm:$0xff] %vm487, 0.0
        %493 = vst.msk [vmem:[#allocation3 + $0x8] sm:$0xff] %vm487, 0.0
        %494 = vst.msk [vmem:[#allocation3 + $0x10] sm:$0xff] %vm487, 0.0
        %495 = vst.msk [vmem:[#allocation3 + $0x18] sm:$0xff] %vm487, 0.0
        %496 = vst.msk [vmem:[#allocation4] sm:$0xff] %vm487, 0.0
        %497 = vst.msk [vmem:[#allocation4 + $0x8] sm:$0xff] %vm487, 0.0
        %498 = vst.msk [vmem:[#allocation4 + $0x10] sm:$0xff] %vm487, 0.0
        %499 = vst.msk [vmem:[#allocation4 + $0x18] sm:$0xff] %vm487, 0.0
        %500 = vst.msk [vmem:[#allocation5] sm:$0xff] %vm487, 0.0
        %501 = vst.msk [vmem:[#allocation5 + $0x8] sm:$0xff] %vm487, 0.0
        %502 = vst.msk [vmem:[#allocation5 + $0x10] sm:$0xff] %vm487, 0.0
        %503 = vst.msk [vmem:[#allocation5 + $0x18] sm:$0xff] %vm487, 0.0
        %504 = vst.msk [vmem:[#allocation6] sm:$0xff] %vm487, 0.0
        %505 = vst.msk [vmem:[#allocation6 + $0x8] sm:$0xff] %vm487, 0.0
        %506 = vst.msk [vmem:[#allocation6 + $0x10] sm:$0xff] %vm487, 0.0
        %507 = vst.msk [vmem:[#allocation6 + $0x18] sm:$0xff] %vm487, 0.0
      $region48: #{hybrid_mimicking_losses.3} parent=43 // pred_fallthru
        _
      %v508 = vld [vmem:[%s465] sm:$0xff]
      %v509 = vld [vmem:[%s472] sm:$0xff]
      %v510 = vld [vmem:[%s428] sm:$0xf]
      %v511 = vunpack.c.l.bf16 %v510
      %v512 = vld [vmem:[%s438] sm:$0xf]
      %v513 = vunpack.c.l.bf16 %v512
      %515 = vset.pattern.permute.xlu0 0
      %516 = vperm.xlu0 %515, %v508
      %v517 = vpop.permute.xlu0 %516
      %v519 = vmul.f32 %v511, %v517
      %521 = vset.pattern.permute.xlu0 0
      %522 = vperm.xlu0 %521, %v509
      %v523 = vpop.permute.xlu0 %522
      %v525 = vmul.f32 %v513, %v523
      %v526 = vadd.f32 %v519, %v525
      %v527 = vpack.c.bf16 %v526, %v526
      %v528 = vsub.f32 %v519, %v525
      %v529 = vpack.c.bf16 %v528, %v528
      %v530 = vadd.f32 %v511, %v513
      %v531 = vpack.c.bf16 %v530, %v530
      %v532 = vsub.f32 %v511, %v513
      %v533 = vpack.c.bf16 %v532, %v532
      %v534 = vld [vmem:[%s448] sm:$0xf]
      %v535 = vunpack.c.l.bf16 %v534
      %v536 = vld [vmem:[%s458] sm:$0xf]
      %v537 = vunpack.c.l.bf16 %v536
      %v538 = vmul.f32 %v535, %v517
      %v539 = vmul.f32 %v537, %v523
      %v540 = vadd.f32 %v538, %v539
      %v541 = vpack.c.bf16 %v540, %v540
      %v542 = vsub.f32 %v538, %v539
      %v543 = vpack.c.bf16 %v542, %v542
      %v544 = vadd.f32 %v535, %v537
      %v545 = vpack.c.bf16 %v544, %v544
      %v546 = vsub.f32 %v535, %v537
      %v547 = vpack.c.bf16 %v546, %v546
      %v548 = vld [vmem:[#allocation2] sm:$0xff]
      %v549 = vld [vmem:[#allocation2 + $0x8] sm:$0xff]
      %v550 = vld [vmem:[#allocation2 + $0x10] sm:$0xff]
      %v551 = vld [vmem:[#allocation2 + $0x18] sm:$0xff]
      %552 = vxpose.xlu0.c.b16.start [1/8] %v527, 128
      %553 = vxpose.xlu0.c.b16.cont [2/8] 0, 128
      %554 = vxpose.xlu0.c.b16.cont [3/8] 0, 128
      %555 = vxpose.xlu0.c.b16.cont [4/8] 0, 128
      %556 = vxpose.xlu0.c.b16.cont [5/8] 0, 128
      %557 = vxpose.xlu0.c.b16.cont [6/8] 0, 128
      %558 = vxpose.xlu0.c.b16.cont [7/8] 0, 128
      %559 = vxpose.xlu0.c.b16.end [8/8] 0, 128
      %v560 = vpop.trf.xlu0
      %v561 = vpop.trf.xlu0
      %v562 = vpop.trf.xlu0
      %v563 = vpop.trf.xlu0
      %v564 = vpop.trf.xlu0
      %v565 = vpop.trf.xlu0
      %v566 = vpop.trf.xlu0
      %v567 = vpop.trf.xlu0
      %vm568 = vcmask 64512
      %v570 = vsel %vm568, %v560, 0
      %v573 = vsel %vm568, %v561, 0
      %vm575 = vcmask 1043456
      %v577 = vsel %vm575, %v541, 0
      %579 = vmatprep.subr.bf16.mxu0 0
      %580 = vmatpush1.bf16.msra.mxu0 %v577
      %581 = vmatprep.subr.bf16.mxu0 0
      %582 = vmatpush1.bf16.msra.mxu0 0
      %583 = vmatprep.subr.bf16.mxu0 0
      %584 = vmatpush1.bf16.msra.mxu0 0
      %585 = vmatprep.subr.bf16.mxu0 0
      %586 = vmatpush1.bf16.msra.mxu0 0
      %587 = vmatprep.subr.bf16.mxu0 0
      %588 = vmatpush1.bf16.msra.mxu0 0
      %589 = vmatprep.subr.bf16.mxu0 0
      %590 = vmatpush1.bf16.msra.mxu0 0
      %591 = vmatprep.subr.bf16.mxu0 0
      %592 = vmatpush1.bf16.msra.mxu0 0
      %593 = vmatprep.subr.bf16.mxu0 0
      %594 = vmatpush1.bf16.msra.mxu0 0
      %595 = vmatprep.subr.bf16.mxu0 0
      %596 = vmatpush1.bf16.msra.mxu0 0
      %597 = vmatprep.subr.bf16.mxu0 0
      %598 = vmatpush1.bf16.msra.mxu0 0
      %599 = vmatprep.subr.bf16.mxu0 0
      %600 = vmatpush1.bf16.msra.mxu0 0
      %601 = vmatprep.subr.bf16.mxu0 0
      %602 = vmatpush1.bf16.msra.mxu0 0
      %603 = vmatprep.subr.bf16.mxu0 0
      %604 = vmatpush1.bf16.msra.mxu0 0
      %605 = vmatprep.subr.bf16.mxu0 0
      %606 = vmatpush1.bf16.msra.mxu0 0
      %607 = vmatprep.subr.bf16.mxu0 0
      %608 = vmatpush1.bf16.msra.mxu0 0
      %609 = vmatprep.subr.bf16.mxu0 0
      %610 = vmatpush1.bf16.msra.mxu0 0
      %611 = vmatprep.mubr.bf16.mxu0 0
      %612 = vmatmul.mubr.bf16.gmra.mrb[0].mxu0 %v570
      %v613 = vpop.f32.mrb[0].mxu0
      %v614 = vadd.f32 0.0, %v613
      %v615 = vpop.f32.mrb[0].mxu0
      %v616 = vpop.f32.mrb[0].mxu0
      %v617 = vadd.f32 0.0, %v616
      %v618 = vpop.f32.mrb[0].mxu0
      %619 = vmatprep.mubr.bf16.mxu0 0
      %620 = vmatmul.mubr.bf16.gmra.mrb[0].mxu0 %v573
      %v621 = vpop.f32.mrb[0].mxu0
      %v622 = vadd.f32 0.0, %v621
      %v623 = vpop.f32.mrb[0].mxu0
      %v624 = vpop.f32.mrb[0].mxu0
      %v625 = vadd.f32 0.0, %v624
      %v626 = vpop.f32.mrb[0].mxu0
      %627 = vdwg.mxu0
      %v628 = vadd.f32 %v548, %v614
      %v629 = vadd.f32 %v549, %v617
      %v630 = vadd.f32 %v550, %v622
      %v631 = vadd.f32 %v551, %v625
      %vm632 = vcmask 261120
      %633 = vst.msk [vmem:[#allocation2] sm:$0xff] %vm632, %v628
      %634 = vst.msk [vmem:[#allocation2 + $0x8] sm:$0xff] %vm632, %v629
      %635 = vst.msk [vmem:[#allocation2 + $0x10] sm:$0xff] %vm632, %v630
      %636 = vst.msk [vmem:[#allocation2 + $0x18] sm:$0xff] %vm632, %v631
      %v637 = vld [vmem:[#allocation3] sm:$0xff]
      %v638 = vld [vmem:[#allocation3 + $0x8] sm:$0xff]
      %v639 = vld [vmem:[#allocation3 + $0x10] sm:$0xff]
      %v640 = vld [vmem:[#allocation3 + $0x18] sm:$0xff]
      %641 = vxpose.xlu0.c.b16.start [1/8] %v529, 128
      %642 = vxpose.xlu0.c.b16.cont [2/8] 0, 128
      %643 = vxpose.xlu0.c.b16.cont [3/8] 0, 128
      %644 = vxpose.xlu0.c.b16.cont [4/8] 0, 128
      %645 = vxpose.xlu0.c.b16.cont [5/8] 0, 128
      %646 = vxpose.xlu0.c.b16.cont [6/8] 0, 128
      %647 = vxpose.xlu0.c.b16.cont [7/8] 0, 128
      %648 = vxpose.xlu0.c.b16.end [8/8] 0, 128
      %v649 = vpop.trf.xlu0
      %v650 = vpop.trf.xlu0
      %v651 = vpop.trf.xlu0
      %v652 = vpop.trf.xlu0
      %v653 = vpop.trf.xlu0
      %v654 = vpop.trf.xlu0
      %v655 = vpop.trf.xlu0
      %v656 = vpop.trf.xlu0
      %v658 = vsel %vm568, %v649, 0
      %v661 = vsel %vm568, %v650, 0
      %v664 = vsel %vm575, %v543, 0
      %666 = vmatprep.subr.bf16.mxu0 0
      %667 = vmatpush1.bf16.msra.mxu0 %v664
      %668 = vmatprep.subr.bf16.mxu0 0
      %669 = vmatpush1.bf16.msra.mxu0 0
      %670 = vmatprep.subr.bf16.mxu0 0
      %671 = vmatpush1.bf16.msra.mxu0 0
      %672 = vmatprep.subr.bf16.mxu0 0
      %673 = vmatpush1.bf16.msra.mxu0 0
      %674 = vmatprep.subr.bf16.mxu0 0
      %675 = vmatpush1.bf16.msra.mxu0 0
      %676 = vmatprep.subr.bf16.mxu0 0
      %677 = vmatpush1.bf16.msra.mxu0 0
      %678 = vmatprep.subr.bf16.mxu0 0
      %679 = vmatpush1.bf16.msra.mxu0 0
      %680 = vmatprep.subr.bf16.mxu0 0
      %681 = vmatpush1.bf16.msra.mxu0 0
      %682 = vmatprep.subr.bf16.mxu0 0
      %683 = vmatpush1.bf16.msra.mxu0 0
      %684 = vmatprep.subr.bf16.mxu0 0
      %685 = vmatpush1.bf16.msra.mxu0 0
      %686 = vmatprep.subr.bf16.mxu0 0
      %687 = vmatpush1.bf16.msra.mxu0 0
      %688 = vmatprep.subr.bf16.mxu0 0
      %689 = vmatpush1.bf16.msra.mxu0 0
      %690 = vmatprep.subr.bf16.mxu0 0
      %691 = vmatpush1.bf16.msra.mxu0 0
      %692 = vmatprep.subr.bf16.mxu0 0
      %693 = vmatpush1.bf16.msra.mxu0 0
      %694 = vmatprep.subr.bf16.mxu0 0
      %695 = vmatpush1.bf16.msra.mxu0 0
      %696 = vmatprep.subr.bf16.mxu0 0
      %697 = vmatpush1.bf16.msra.mxu0 0
      %698 = vmatprep.mubr.bf16.mxu0 0
      %699 = vmatmul.mubr.bf16.gmra.mrb[0].mxu0 %v658
      %v700 = vpop.f32.mrb[0].mxu0
      %v701 = vadd.f32 0.0, %v700
      %v702 = vpop.f32.mrb[0].mxu0
      %v703 = vpop.f32.mrb[0].mxu0
      %v704 = vadd.f32 0.0, %v703
      %v705 = vpop.f32.mrb[0].mxu0
      %706 = vmatprep.mubr.bf16.mxu0 0
      %707 = vmatmul.mubr.bf16.gmra.mrb[0].mxu0 %v661
      %v708 = vpop.f32.mrb[0].mxu0
      %v709 = vadd.f32 0.0, %v708
      %v710 = vpop.f32.mrb[0].mxu0
      %v711 = vpop.f32.mrb[0].mxu0
      %v712 = vadd.f32 0.0, %v711
      %v713 = vpop.f32.mrb[0].mxu0
      %714 = vdwg.mxu0
      %v715 = vadd.f32 %v637, %v701
      %v716 = vadd.f32 %v638, %v704
      %v717 = vadd.f32 %v639, %v709
      %v718 = vadd.f32 %v640, %v712
      %719 = vst.msk [vmem:[#allocation3] sm:$0xff] %vm632, %v715
      %720 = vst.msk [vmem:[#allocation3 + $0x8] sm:$0xff] %vm632, %v716
      %721 = vst.msk [vmem:[#allocation3 + $0x10] sm:$0xff] %vm632, %v717
      %722 = vst.msk [vmem:[#allocation3 + $0x18] sm:$0xff] %vm632, %v718
      %v723 = vld [vmem:[#allocation4] sm:$0xff]
      %v724 = vld [vmem:[#allocation4 + $0x8] sm:$0xff]
      %v725 = vld [vmem:[#allocation4 + $0x10] sm:$0xff]
      %v726 = vld [vmem:[#allocation4 + $0x18] sm:$0xff]
      %727 = vmatprep.subr.bf16.mxu0 0
      %728 = vmatpush1.bf16.msra.mxu0 %v577
      %729 = vmatprep.subr.bf16.mxu0 0
      %730 = vmatpush1.bf16.msra.mxu0 0
      %731 = vmatprep.subr.bf16.mxu0 0
      %732 = vmatpush1.bf16.msra.mxu0 0
      %733 = vmatprep.subr.bf16.mxu0 0
      %734 = vmatpush1.bf16.msra.mxu0 0
      %735 = vmatprep.subr.bf16.mxu0 0
      %736 = vmatpush1.bf16.msra.mxu0 0
      %737 = vmatprep.subr.bf16.mxu0 0
      %738 = vmatpush1.bf16.msra.mxu0 0
      %739 = vmatprep.subr.bf16.mxu0 0
      %740 = vmatpush1.bf16.msra.mxu0 0
      %741 = vmatprep.subr.bf16.mxu0 0
      %742 = vmatpush1.bf16.msra.mxu0 0
      %743 = vmatprep.subr.bf16.mxu0 0
      %744 = vmatpush1.bf16.msra.mxu0 0
      %745 = vmatprep.subr.bf16.mxu0 0
      %746 = vmatpush1.bf16.msra.mxu0 0
      %747 = vmatprep.subr.bf16.mxu0 0
      %748 = vmatpush1.bf16.msra.mxu0 0
      %749 = vmatprep.subr.bf16.mxu0 0
      %750 = vmatpush1.bf16.msra.mxu0 0
      %751 = vmatprep.subr.bf16.mxu0 0
      %752 = vmatpush1.bf16.msra.mxu0 0
      %753 = vmatprep.subr.bf16.mxu0 0
      %754 = vmatpush1.bf16.msra.mxu0 0
      %755 = vmatprep.subr.bf16.mxu0 0
      %756 = vmatpush1.bf16.msra.mxu0 0
      %757 = vmatprep.subr.bf16.mxu0 0
      %758 = vmatpush1.bf16.msra.mxu0 0
      %759 = vmatprep.mubr.bf16.mxu0 0
      %760 = vmatmul.mubr.bf16.gmra.mrb[0].mxu0 %v658
      %v761 = vpop.f32.mrb[0].mxu0
      %v762 = vadd.f32 0.0, %v761
      %v763 = vpop.f32.mrb[0].mxu0
      %v764 = vpop.f32.mrb[0].mxu0
      %v765 = vadd.f32 0.0, %v764
      %v766 = vpop.f32.mrb[0].mxu0
      %767 = vmatprep.mubr.bf16.mxu0 0
      %768 = vmatmul.mubr.bf16.gmra.mrb[0].mxu0 %v661
      %v769 = vpop.f32.mrb[0].mxu0
      %v770 = vadd.f32 0.0, %v769
      %v771 = vpop.f32.mrb[0].mxu0
      %v772 = vpop.f32.mrb[0].mxu0
      %v773 = vadd.f32 0.0, %v772
      %v774 = vpop.f32.mrb[0].mxu0
      %775 = vdwg.mxu0
      %v776 = vadd.f32 %v723, %v762
      %v777 = vadd.f32 %v724, %v765
      %v778 = vadd.f32 %v725, %v770
      %v779 = vadd.f32 %v726, %v773
      %780 = vst.msk [vmem:[#allocation4] sm:$0xff] %vm632, %v776
      %781 = vst.msk [vmem:[#allocation4 + $0x8] sm:$0xff] %vm632, %v777
      %782 = vst.msk [vmem:[#allocation4 + $0x10] sm:$0xff] %vm632, %v778
      %783 = vst.msk [vmem:[#allocation4 + $0x18] sm:$0xff] %vm632, %v779
      %v784 = vld [vmem:[#allocation5] sm:$0xff]
      %v785 = vld [vmem:[#allocation5 + $0x8] sm:$0xff]
      %v786 = vld [vmem:[#allocation5 + $0x10] sm:$0xff]
      %v787 = vld [vmem:[#allocation5 + $0x18] sm:$0xff]
      %788 = vmatprep.subr.bf16.mxu0 0
      %789 = vmatpush1.bf16.msra.mxu0 %v664
      %790 = vmatprep.subr.bf16.mxu0 0
      %791 = vmatpush1.bf16.msra.mxu0 0
      %792 = vmatprep.subr.bf16.mxu0 0
      %793 = vmatpush1.bf16.msra.mxu0 0
      %794 = vmatprep.subr.bf16.mxu0 0
      %795 = vmatpush1.bf16.msra.mxu0 0
      %796 = vmatprep.subr.bf16.mxu0 0
      %797 = vmatpush1.bf16.msra.mxu0 0
      %798 = vmatprep.subr.bf16.mxu0 0
      %799 = vmatpush1.bf16.msra.mxu0 0
      %800 = vmatprep.subr.bf16.mxu0 0
      %801 = vmatpush1.bf16.msra.mxu0 0
      %802 = vmatprep.subr.bf16.mxu0 0
      %803 = vmatpush1.bf16.msra.mxu0 0
      %804 = vmatprep.subr.bf16.mxu0 0
      %805 = vmatpush1.bf16.msra.mxu0 0
      %806 = vmatprep.subr.bf16.mxu0 0
      %807 = vmatpush1.bf16.msra.mxu0 0
      %808 = vmatprep.subr.bf16.mxu0 0
      %809 = vmatpush1.bf16.msra.mxu0 0
      %810 = vmatprep.subr.bf16.mxu0 0
      %811 = vmatpush1.bf16.msra.mxu0 0
      %812 = vmatprep.subr.bf16.mxu0 0
      %813 = vmatpush1.bf16.msra.mxu0 0
      %814 = vmatprep.subr.bf16.mxu0 0
      %815 = vmatpush1.bf16.msra.mxu0 0
      %816 = vmatprep.subr.bf16.mxu0 0
      %817 = vmatpush1.bf16.msra.mxu0 0
      %818 = vmatprep.subr.bf16.mxu0 0
      %819 = vmatpush1.bf16.msra.mxu0 0
      %820 = vmatprep.mubr.bf16.mxu0 0
      %821 = vmatmul.mubr.bf16.gmra.mrb[0].mxu0 %v570
      %v822 = vpop.f32.mrb[0].mxu0
      %v823 = vadd.f32 0.0, %v822
      %v824 = vpop.f32.mrb[0].mxu0
      %v825 = vpop.f32.mrb[0].mxu0
      %v826 = vadd.f32 0.0, %v825
      %v827 = vpop.f32.mrb[0].mxu0
      %828 = vmatprep.mubr.bf16.mxu0 0
      %829 = vmatmul.mubr.bf16.gmra.mrb[0].mxu0 %v573
      %v830 = vpop.f32.mrb[0].mxu0
      %v831 = vadd.f32 0.0, %v830
      %v832 = vpop.f32.mrb[0].mxu0
      %v833 = vpop.f32.mrb[0].mxu0
      %v834 = vadd.f32 0.0, %v833
      %v835 = vpop.f32.mrb[0].mxu0
      %836 = vdwg.mxu0
      %v837 = vadd.f32 %v784, %v823
      %v838 = vadd.f32 %v785, %v826
      %v839 = vadd.f32 %v786, %v831
      %v840 = vadd.f32 %v787, %v834
      %841 = vst.msk [vmem:[#allocation5] sm:$0xff] %vm632, %v837
      %842 = vst.msk [vmem:[#allocation5 + $0x8] sm:$0xff] %vm632, %v838
      %843 = vst.msk [vmem:[#allocation5 + $0x10] sm:$0xff] %vm632, %v839
      %844 = vst.msk [vmem:[#allocation5 + $0x18] sm:$0xff] %vm632, %v840
      %v845 = vld [vmem:[#allocation6] sm:$0xff]
      %v846 = vld [vmem:[#allocation6 + $0x8] sm:$0xff]
      %v847 = vld [vmem:[#allocation6 + $0x10] sm:$0xff]
      %v848 = vld [vmem:[#allocation6 + $0x18] sm:$0xff]
      %849 = vxpose.xlu0.c.b16.start [1/8] %v533, 128
      %850 = vxpose.xlu0.c.b16.cont [2/8] 0, 128
      %851 = vxpose.xlu0.c.b16.cont [3/8] 0, 128
      %852 = vxpose.xlu0.c.b16.cont [4/8] 0, 128
      %853 = vxpose.xlu0.c.b16.cont [5/8] 0, 128
      %854 = vxpose.xlu0.c.b16.cont [6/8] 0, 128
      %855 = vxpose.xlu0.c.b16.cont [7/8] 0, 128
      %856 = vxpose.xlu0.c.b16.end [8/8] 0, 128
      %v857 = vpop.trf.xlu0
      %v858 = vpop.trf.xlu0
      %v859 = vpop.trf.xlu0
      %v860 = vpop.trf.xlu0
      %v861 = vpop.trf.xlu0
      %v862 = vpop.trf.xlu0
      %v863 = vpop.trf.xlu0
      %v864 = vpop.trf.xlu0
      %v866 = vsel %vm568, %v857, 0
      %v869 = vsel %vm568, %v858, 0
      %v872 = vsel %vm575, %v545, 0
      %874 = vmatprep.subr.bf16.mxu0 0
      %875 = vmatpush1.bf16.msra.mxu0 %v872
      %876 = vmatprep.subr.bf16.mxu0 0
      %877 = vmatpush1.bf16.msra.mxu0 0
      %878 = vmatprep.subr.bf16.mxu0 0
      %879 = vmatpush1.bf16.msra.mxu0 0
      %880 = vmatprep.subr.bf16.mxu0 0
      %881 = vmatpush1.bf16.msra.mxu0 0
      %882 = vmatprep.subr.bf16.mxu0 0
      %883 = vmatpush1.bf16.msra.mxu0 0
      %884 = vmatprep.subr.bf16.mxu0 0
      %885 = vmatpush1.bf16.msra.mxu0 0
      %886 = vmatprep.subr.bf16.mxu0 0
      %887 = vmatpush1.bf16.msra.mxu0 0
      %888 = vmatprep.subr.bf16.mxu0 0
      %889 = vmatpush1.bf16.msra.mxu0 0
      %890 = vmatprep.subr.bf16.mxu0 0
      %891 = vmatpush1.bf16.msra.mxu0 0
      %892 = vmatprep.subr.bf16.mxu0 0
      %893 = vmatpush1.bf16.msra.mxu0 0
      %894 = vmatprep.subr.bf16.mxu0 0
      %895 = vmatpush1.bf16.msra.mxu0 0
      %896 = vmatprep.subr.bf16.mxu0 0
      %897 = vmatpush1.bf16.msra.mxu0 0
      %898 = vmatprep.subr.bf16.mxu0 0
      %899 = vmatpush1.bf16.msra.mxu0 0
      %900 = vmatprep.subr.bf16.mxu0 0
      %901 = vmatpush1.bf16.msra.mxu0 0
      %902 = vmatprep.subr.bf16.mxu0 0
      %903 = vmatpush1.bf16.msra.mxu0 0
      %904 = vmatprep.subr.bf16.mxu0 0
      %905 = vmatpush1.bf16.msra.mxu0 0
      %906 = vmatprep.mubr.bf16.mxu0 0
      %907 = vmatmul.mubr.bf16.gmra.mrb[0].mxu0 %v866
      %v908 = vpop.f32.mrb[0].mxu0
      %v909 = vadd.f32 0.0, %v908
      %v910 = vpop.f32.mrb[0].mxu0
      %v911 = vpop.f32.mrb[0].mxu0
      %v912 = vadd.f32 0.0, %v911
      %v913 = vpop.f32.mrb[0].mxu0
      %914 = vmatprep.mubr.bf16.mxu0 0
      %915 = vmatmul.mubr.bf16.gmra.mrb[0].mxu0 %v869
      %v916 = vpop.f32.mrb[0].mxu0
      %v917 = vadd.f32 0.0, %v916
      %v918 = vpop.f32.mrb[0].mxu0
      %v919 = vpop.f32.mrb[0].mxu0
      %v920 = vadd.f32 0.0, %v919
      %v921 = vpop.f32.mrb[0].mxu0
      %922 = vdwg.mxu0
      %923 = vxpose.xlu0.c.b16.start [1/8] %v531, 128
      %924 = vxpose.xlu0.c.b16.cont [2/8] 0, 128
      %925 = vxpose.xlu0.c.b16.cont [3/8] 0, 128
      %926 = vxpose.xlu0.c.b16.cont [4/8] 0, 128
      %927 = vxpose.xlu0.c.b16.cont [5/8] 0, 128
      %928 = vxpose.xlu0.c.b16.cont [6/8] 0, 128
      %929 = vxpose.xlu0.c.b16.cont [7/8] 0, 128
      %930 = vxpose.xlu0.c.b16.end [8/8] 0, 128
      %v931 = vpop.trf.xlu0
      %v932 = vpop.trf.xlu0
      %v933 = vpop.trf.xlu0
      %v934 = vpop.trf.xlu0
      %v935 = vpop.trf.xlu0
      %v936 = vpop.trf.xlu0
      %v937 = vpop.trf.xlu0
      %v938 = vpop.trf.xlu0
      %v940 = vsel %vm568, %v931, 0
      %v943 = vsel %vm568, %v932, 0
      %v946 = vsel %vm575, %v547, 0
      %948 = vmatprep.subr.bf16.mxu0 0
      %949 = vmatpush1.bf16.msra.mxu0 %v946
      %950 = vmatprep.subr.bf16.mxu0 0
      %951 = vmatpush1.bf16.msra.mxu0 0
      %952 = vmatprep.subr.bf16.mxu0 0
      %953 = vmatpush1.bf16.msra.mxu0 0
      %954 = vmatprep.subr.bf16.mxu0 0
      %955 = vmatpush1.bf16.msra.mxu0 0
      %956 = vmatprep.subr.bf16.mxu0 0
      %957 = vmatpush1.bf16.msra.mxu0 0
      %958 = vmatprep.subr.bf16.mxu0 0
      %959 = vmatpush1.bf16.msra.mxu0 0
      %960 = vmatprep.subr.bf16.mxu0 0
      %961 = vmatpush1.bf16.msra.mxu0 0
      %962 = vmatprep.subr.bf16.mxu0 0
      %963 = vmatpush1.bf16.msra.mxu0 0
      %964 = vmatprep.subr.bf16.mxu0 0
      %965 = vmatpush1.bf16.msra.mxu0 0
      %966 = vmatprep.subr.bf16.mxu0 0
      %967 = vmatpush1.bf16.msra.mxu0 0
      %968 = vmatprep.subr.bf16.mxu0 0
      %969 = vmatpush1.bf16.msra.mxu0 0
      %970 = vmatprep.subr.bf16.mxu0 0
      %971 = vmatpush1.bf16.msra.mxu0 0
      %972 = vmatprep.subr.bf16.mxu0 0
      %973 = vmatpush1.bf16.msra.mxu0 0
      %974 = vmatprep.subr.bf16.mxu0 0
      %975 = vmatpush1.bf16.msra.mxu0 0
      %976 = vmatprep.subr.bf16.mxu0 0
      %977 = vmatpush1.bf16.msra.mxu0 0
      %978 = vmatprep.subr.bf16.mxu0 0
      %979 = vmatpush1.bf16.msra.mxu0 0
      %980 = vmatprep.mubr.bf16.mxu0 0
      %981 = vmatmul.mubr.bf16.gmra.mrb[0].mxu0 %v940
      %v982 = vpop.f32.mrb[0].mxu0
      %v983 = vadd.f32 %v909, %v982
      %v984 = vpop.f32.mrb[0].mxu0
      %v985 = vpop.f32.mrb[0].mxu0
      %v986 = vadd.f32 %v912, %v985
      %v987 = vpop.f32.mrb[0].mxu0
      %988 = vmatprep.mubr.bf16.mxu0 0
      %989 = vmatmul.mubr.bf16.gmra.mrb[0].mxu0 %v943
      %v990 = vpop.f32.mrb[0].mxu0
      %v991 = vadd.f32 %v917, %v990
      %v992 = vpop.f32.mrb[0].mxu0
      %v993 = vpop.f32.mrb[0].mxu0
      %v994 = vadd.f32 %v920, %v993
      %v995 = vpop.f32.mrb[0].mxu0
      %996 = vdwg.mxu0
      %v997 = vadd.f32 %v845, %v983
      %v998 = vadd.f32 %v846, %v986
      %v999 = vadd.f32 %v847, %v991
      %v1000 = vadd.f32 %v848, %v994
      %1001 = vst.msk [vmem:[#allocation6] sm:$0xff] %vm632, %v997
      %1002 = vst.msk [vmem:[#allocation6 + $0x8] sm:$0xff] %vm632, %v998
      %1003 = vst.msk [vmem:[#allocation6 + $0x10] sm:$0xff] %vm632, %v999
      %1004 = vst.msk [vmem:[#allocation6 + $0x18] sm:$0xff] %vm632, %v1000
      // Predicated region
      $region49: #{hybrid_mimicking_losses.3} parent=43 // pred_check
        %p1005 = pneg %p483
      $region50: #{hybrid_mimicking_losses.3} parent=43 // pred_check_branch
        %1007 = sbr.rel (%p1005) target = $region52
      $region51: #{hybrid_mimicking_losses.3} parent=43 // pred_region
        %v1008 = vld [vmem:[#allocation2] sm:$0xff]
        %v1009 = vld [vmem:[#allocation2 + $0x8] sm:$0xff]
        %v1010 = vld [vmem:[#allocation2 + $0x10] sm:$0xff]
        %v1011 = vld [vmem:[#allocation2 + $0x18] sm:$0xff]
        %v1012 = vld [vmem:[#allocation3] sm:$0xff]
        %v1013 = vld [vmem:[#allocation3 + $0x8] sm:$0xff]
        %v1014 = vld [vmem:[#allocation3 + $0x10] sm:$0xff]
        %v1015 = vld [vmem:[#allocation3 + $0x18] sm:$0xff]
        %v1016 = vmul.f32 %v1008, %v1012
        %v1017 = vmul.f32 %v1009, %v1013
        %v1018 = vmul.f32 %v1010, %v1014
        %v1019 = vmul.f32 %v1011, %v1015
        %v1020 = vsel %vm632, %v1016, 0.0
        %v1021 = vsel %vm632, %v1017, 0.0
        %v1022 = vadd.f32 %v1020, %v1021
        %v1023 = vsel %vm632, %v1018, 0.0
        %v1024 = vadd.f32 %v1022, %v1023
        %v1025 = vsel %vm632, %v1019, 0.0
        %v1026 = vadd.f32 %v1024, %v1025
        %1027 = vadd.xlane.f32.xlu0 %v1026
        %v1028 = vpop.xlane.xlu0 %1027
        %v1029 = vrot.slane %v1028, 4
        %v1030 = vadd.f32 %v1028, %v1029
        %v1031 = vrot.slane %v1030, 2
        %v1032 = vadd.f32 %v1030, %v1031
        %v1033 = vrot.slane %v1032, 1
        %v1034 = vadd.f32 %v1032, %v1033
        %s1035 = vtos %v1034
        %v1036 = vld [vmem:[#allocation4] sm:$0xff]
        %v1037 = vld [vmem:[#allocation4 + $0x8] sm:$0xff]
        %v1038 = vld [vmem:[#allocation4 + $0x10] sm:$0xff]
        %v1039 = vld [vmem:[#allocation4 + $0x18] sm:$0xff]
        %v1040 = vld [vmem:[#allocation5] sm:$0xff]
        %v1041 = vld [vmem:[#allocation5 + $0x8] sm:$0xff]
        %v1042 = vld [vmem:[#allocation5 + $0x10] sm:$0xff]
        %v1043 = vld [vmem:[#allocation5 + $0x18] sm:$0xff]
        %v1044 = vmul.f32 %v1036, %v1040
        %v1045 = vmul.f32 %v1037, %v1041
        %v1046 = vmul.f32 %v1038, %v1042
        %v1047 = vmul.f32 %v1039, %v1043
        %v1048 = vsel %vm632, %v1044, 0.0
        %v1049 = vsel %vm632, %v1045, 0.0
        %v1050 = vadd.f32 %v1048, %v1049
        %v1051 = vsel %vm632, %v1046, 0.0
        %v1052 = vadd.f32 %v1050, %v1051
        %v1053 = vsel %vm632, %v1047, 0.0
        %v1054 = vadd.f32 %v1052, %v1053
        %1055 = vadd.xlane.f32.xlu0 %v1054
        %v1056 = vpop.xlane.xlu0 %1055
        %v1057 = vrot.slane %v1056, 4
        %v1058 = vadd.f32 %v1056, %v1057
        %v1059 = vrot.slane %v1058, 2
        %v1060 = vadd.f32 %v1058, %v1059
        %v1061 = vrot.slane %v1060, 1
        %v1062 = vadd.f32 %v1060, %v1061
        %s1063 = vtos %v1062
        %s1064 = sadd.f32 %s1035, %s1063
        %s1065 = smul.f32 %s1064, 0.5
        %v1066 = vld [vmem:[#allocation6] sm:$0xff]
        %v1067 = vld [vmem:[#allocation6 + $0x8] sm:$0xff]
        %v1068 = vld [vmem:[#allocation6 + $0x10] sm:$0xff]
        %v1069 = vld [vmem:[#allocation6 + $0x18] sm:$0xff]
        %v1070 = vmul.f32 %v1066, %v1066
        %v1071 = vmul.f32 %v1067, %v1067
        %v1072 = vmul.f32 %v1068, %v1068
        %v1073 = vmul.f32 %v1069, %v1069
        %v1074 = vsel %vm632, %v1070, 0.0
        %v1075 = vsel %vm632, %v1071, 0.0
        %v1076 = vadd.f32 %v1074, %v1075
        %v1077 = vsel %vm632, %v1072, 0.0
        %v1078 = vadd.f32 %v1076, %v1077
        %v1079 = vsel %vm632, %v1073, 0.0
        %v1080 = vadd.f32 %v1078, %v1079
        %1081 = vadd.xlane.f32.xlu0 %v1080
        %v1082 = vpop.xlane.xlu0 %1081
        %v1083 = vrot.slane %v1082, 4
        %v1084 = vadd.f32 %v1082, %v1083
        %v1085 = vrot.slane %v1084, 2
        %v1086 = vadd.f32 %v1084, %v1085
        %v1087 = vrot.slane %v1086, 1
        %v1088 = vadd.f32 %v1086, %v1087
        %s1089 = vtos %v1088
        %s1090 = smul.f32 %s1089, 0.25
        %v1091 = vlaneseq
        %v1092 = vand.u32 %v1091, 127
        %vm1093 = vcmp.eq.s32.totalorder %v1092, 0
        %v1094 = vstv %s1065
        %v1095 = vsel %vm1093, %v1094, 0.0
        %vm1096 = vcmp.eq.s32.totalorder %v1092, 1
        %v1097 = vstv %s1090
        %v1098 = vsel %vm1096, %v1097, 0.0
        %v1099 = vadd.f32 %v1095, %v1098
        %vm1100 = vcmask 57344
        %1101 = vst.msk [vmem:[%s481] sm:$0x1] %vm1100, %v1099
      $region52: #{hybrid_mimicking_losses.3} parent=43 // pred_fallthru
        _
      %p1102 = scmp.lt.s32.totalorder %s23, 7
      %s1103 = scalar_select %p1102, %s23, 7
      %p1104 = scmp.lt.s32.totalorder %s24, 0
      %s1105 = scalar_select %p1104, %s24, 0
      %p1106 = scmp.lt.s32.totalorder %s25, 0
      %s1107 = scalar_select %p1106, %s25, 0
      %s1108 = sadd.s32 %s1107, %s1105
      %s1109 = sadd.s32 %s1108, %s1103
      %s1110 = scalar_lea.vmem %s6, %s1109
      // Predicated region
      $region53: #{hybrid_mimicking_losses.3} parent=43 // pred_check
        %p1111 = pneg %p241
      $region54: #{hybrid_mimicking_losses.3} parent=43 // pred_check_branch
        %1113 = sbr.rel (%p1111) target = $region56
      $region55: #{hybrid_mimicking_losses.3} parent=43 // pred_region
        _
      $region56: #{hybrid_mimicking_losses.3} parent=43 // pred_fallthru
        _
    $region44: #{hybrid_mimicking_losses.3} parent=5 // pred_fallthru
      _
    %p1114 = scmp.le.s32.totalorder 2, %s12
    // Predicated region
    $region57: #{hybrid_mimicking_losses.3} parent=5 // pred_check
      %p1115 = pneg %p1114
    $region58: #{hybrid_mimicking_losses.3} parent=5 // pred_check_branch
      %1117 = sbr.rel (%p1115) target = $region60
    $region59: #{hybrid_mimicking_losses.3} parent=5 // pred_region
      %s1118 = ssub.s32 %s12, 2
      // Predicated region
      $region61: #{hybrid_mimicking_losses.3} parent=59 // pred_check
        %p1119 = pneg %p247
      $region62: #{hybrid_mimicking_losses.3} parent=59 // pred_check_branch
        %1121 = sbr.rel (%p1119) target = $region64
      $region63: #{hybrid_mimicking_losses.3} parent=59 // pred_region
        %p1122 = scmp.lt.s32.totalorder %s27, 7
        %s1123 = scalar_select %p1122, %s27, 7
        %p1124 = scmp.lt.s32.totalorder %s28, 0
        %s1125 = scalar_select %p1124, %s28, 0
        %p1126 = scmp.lt.s32.totalorder %s29, 0
        %s1127 = scalar_select %p1126, %s29, 0
        %s1128 = sadd.s32 %s1127, %s1125
        %s1129 = sadd.s32 %s1128, %s1123
        %s1130 = scalar_lea.vmem %s6, %s1129
      $region64: #{hybrid_mimicking_losses.3} parent=59 // pred_fallthru
        _
    $region60: #{hybrid_mimicking_losses.3} parent=5 // pred_fallthru
      _
  $region6: #{hybrid_mimicking_losses.3} parent=0 // loop_footer
    %s16 = sadd.s32 1, %s12
  $region7: #{hybrid_mimicking_losses.3} parent=0 // loop_footer_branch
    %11 = sbr.rel target = $region3
  $region8: #{hybrid_mimicking_losses.3} parent=0 // loop_exit
    _

</llo_original>
